<compile_context>
chip_gen: v7x
topology: tpu7x:2x2x1
jax: 0.10.0
libtpu: 0.0.40
codegen_flags: <defaults>
</compile_context>

<pallas_src>
import math
import jax
import jax.numpy as jnp
from jax.experimental import pallas as pl
from jax.experimental.pallas import tpu as pltpu

NUM_HEADS = 4  # fixed by the module: nn.MultiheadAttention(rnn_hidden_dim, 4)


# ---------------------------------------------------------------------------
# kernel
# ---------------------------------------------------------------------------
def _make_kernel(H, a, qcols, off):
    """Build the kernel with static shape/offset constants closed over.

    off: static lane offsets into the fused weight slab ('wqkv','wob','w2')
         and the fused bias slab ('b1','bqkv','bgru','b2').
    """
    hd = H // NUM_HEADS
    bf16, f32 = jnp.bfloat16, jnp.float32

    def kernel(x_ref, h_ref, mask_ref, w1_ref, wslab_ref, wgru_ref, bias_ref,
               out_ref):
        R = x_ref.shape[0]          # rows in this tile = tb * a
        TB = R // a                 # batches in this tile

        # static lane slices of the fused bias / weight slabs (128-aligned)
        b1 = bias_ref[:, off["b1"]:off["b1"] + H]
        bqkvx = bias_ref[:, off["bqkv"]:off["bqkv"] + 4 * H]
        bgru = bias_ref[:, off["bgru"]:off["bgru"] + 4 * H]
        b2 = bias_ref[:, off["b2"]:off["b2"] + qcols]
        wqkvx = wslab_ref[:, off["wqkv"]:off["wqkv"] + 4 * H]
        wob = wslab_ref[:, off["wob"]:off["wob"] + H]
        w2 = wslab_ref[:, off["w2"]:off["w2"] + qcols]

        # x = relu(fc1(inputs))                       (bf16 x bf16 -> f32 acc)
        x = jnp.maximum(
            jnp.dot(x_ref[...], w1_ref[...], preferred_element_type=f32) + b1,
            0.0)                                                  # (R, H) f32

        # one fused matmul: [q | k | v | x @ watt_top].  q columns are
        # pre-scaled by 1/sqrt(hd); the last H columns already carry
        # batt + bout @ watt_bot.
        fused = (jnp.dot(x.astype(bf16), wqkvx, preferred_element_type=f32)
                 + bqkvx)                                         # (R, 4H) f32
        acc = fused[:, 3 * H:4 * H]                               # (R, H)  f32
        qkv = fused[:, 0:3 * H].reshape(TB, a, 3 * H)             # (TB, a, 3H)

        # additive mask (finite large-negative; fully-masked rows -> uniform
        # attention, matching the reference's where(-1e30)+softmax, no NaN)
        neg = mask_ref[...].astype(f32) * (-1e30)                 # (R, 4a)

        head_outs = []
        for h in range(NUM_HEADS):
            lo = h * hd
            qh = qkv[:, :, lo:lo + hd].astype(bf16)
            kh = qkv[:, :, H + lo:H + lo + hd].astype(bf16)
            vh = qkv[:, :, 2 * H + lo:2 * H + lo + hd].astype(bf16)
            s = jnp.einsum('bqd,bkd->bqk', qh, kh,
                           preferred_element_type=f32)            # (TB, a, a)
            s = s + neg[:, h * a:(h + 1) * a].reshape(TB, a, a)
            m = jnp.max(s, axis=-1, keepdims=True)
            p = jnp.exp(s - m)
            p = p * pl.reciprocal(jnp.sum(p, axis=-1, keepdims=True),
                                  approx=True)
            oh = jnp.einsum('bqk,bkd->bqd', p.astype(bf16), vh,
                            preferred_element_type=f32)           # (TB, a, hd)
            head_outs.append(oh.reshape(R, hd))

        # fold the MHA out_proj (wout @ watt_bot) with ONE K=H matmul
        o_attn = jnp.concatenate(head_outs, axis=-1)              # (R, H) f32
        acc = acc + jnp.dot(o_attn.astype(bf16), wob,
                            preferred_element_type=f32)
        x2 = jnp.maximum(acc, 0.0)                                # (R, H) f32

        # fused GRUCell: one K=2H matmul, columns [r | z | n_in | n_hid]
        h_prev = h_ref[...]                                       # (R, H) f32
        gin = jnp.concatenate([x2, h_prev], axis=-1).astype(bf16)  # (R, 2H)
        g = jnp.dot(gin, wgru_ref[...], preferred_element_type=f32) + bgru
        r = jax.nn.sigmoid(g[:, 0:H])
        z = jax.nn.sigmoid(g[:, H:2 * H])
        n = jnp.tanh(g[:, 2 * H:3 * H] + r * g[:, 3 * H:4 * H])
        hh = (1.0 - z) * n + z * h_prev                           # (R, H) f32

        # fc2 (lane-padded)
        q_logits = (jnp.dot(hh.astype(bf16), w2, preferred_element_type=f32)
                    + b2)                                         # (R, qcols)

        # single lane-dense (128-multiple) store: [hh | q_padded]
        out_ref[...] = jnp.concatenate([hh, q_logits], axis=-1)

    return kernel


# ---------------------------------------------------------------------------
# wrapper helpers
# ---------------------------------------------------------------------------
def _round_up(x, m):
    return -(-x // m) * m


def _is_v7x():
    try:
        return "v7" in jax.devices()[0].device_kind.lower()
    except Exception:
        return False


def _choose_tile(b, a):
    """Batches per grid step.  Target ~1024 rows/tile; tb*a must be a multiple
    of 8 unless one tile covers the whole batch ((8,128) block rule).  Forcing
    >=2 tiles only pays on v7x (2 TensorCores), so it is gated on chip kind."""
    align = 8 // math.gcd(8, a)          # tb granularity so tb*a % 8 == 0
    target_tb = max(1, 1024 // max(a, 1))
    two_tc = _is_v7x()
    if target_tb >= b and not (two_tc and b >= 4 * align):
        return b, 1                      # single full tile
    tb = min(target_tb, b)
    if two_tc:
        tb = min(tb, _round_up(-(-b // 2), align))
    tb = max(align, (tb // align) * align)
    return tb, -(-b // tb)


def _pad_rows(arr, n_rows):
    if arr.shape[0] == n_rows:
        return arr
    pad = [(0, n_rows - arr.shape[0])] + [(0, 0)] * (arr.ndim - 1)
    return jnp.pad(arr, pad)


def _pad_cols(arr, mult=128):
    pad = (-arr.shape[1]) % mult
    if pad == 0:
        return arr
    return jnp.pad(arr, ((0, 0), (0, pad)))


# ---------------------------------------------------------------------------
# forward
# ---------------------------------------------------------------------------
def nrnn_agent_forward(inputs, hidden_state, drop_inputs, params):
    b, a, e = inputs.shape
    f32, bf16 = jnp.float32, jnp.bfloat16
    H = params["w1"].shape[1]
    nact = params["w2"].shape[1]
    assert H % NUM_HEADS == 0
    hd = H // NUM_HEADS
    scale = 1.0 / math.sqrt(hd)

    # ---------- weight preprocessing (pure linear-algebra folds, done once) --
    win = params["win"].astype(f32)
    bin_ = params["bin"].astype(f32)
    win_s = jnp.concatenate([win[:, :H] * scale, win[:, H:]], axis=1)  # q scale
    bin_s = jnp.concatenate([bin_[:, :H] * scale, bin_[:, H:]], axis=1)

    watt = params["watt"].astype(f32)
    watt_top, watt_bot = watt[:H], watt[H:]
    wob = params["wout"].astype(f32) @ watt_bot                        # (H, H)
    batt_eff = params["batt"].astype(f32) + params["bout"].astype(f32) @ watt_bot

    wqkvx = jnp.concatenate([win_s, watt_top], axis=1)                 # (H, 4H)
    bqkvx = jnp.concatenate([bin_s, batt_eff], axis=1)                 # (1, 4H)

    # fused GRU weight: columns [r | z | n_in | n_hid], contraction K = 2H
    wih, whh = params["wih"].astype(f32), params["whh"].astype(f32)
    zH = jnp.zeros((H, H), f32)
    wgru = jnp.concatenate([
        jnp.concatenate([wih[:, 0:H], wih[:, H:2 * H], wih[:, 2 * H:3 * H], zH],
                        axis=1),
        jnp.concatenate([whh[:, 0:H], whh[:, H:2 * H], zH, whh[:, 2 * H:3 * H]],
                        axis=1),
    ], axis=0)                                                         # (2H, 4H)
    bih, bhh = params["bih"].astype(f32), params["bhh"].astype(f32)
    bgru = jnp.concatenate([bih[:, 0:H] + bhh[:, 0:H],
                            bih[:, H:2 * H] + bhh[:, H:2 * H],
                            bih[:, 2 * H:3 * H], bhh[:, 2 * H:3 * H]], axis=1)

    # lane-dense output slab: [hh (H) | q padded to qcols]
    slab = _round_up(H + nact, 128)
    qcols = slab - H
    w2p = jnp.zeros((H, qcols), f32).at[:, :nact].set(params["w2"].astype(f32))
    b2p = jnp.zeros((1, qcols), f32).at[:, :nact].set(params["b2"].astype(f32))

    # one bf16 K=H weight slab and one f32 bias slab, 128-lane aligned groups
    wqkv_p, wob_p, w2_p = _pad_cols(wqkvx), _pad_cols(wob), _pad_cols(w2p)
    off = {
        "wqkv": 0,
        "wob": wqkv_p.shape[1],
        "w2": wqkv_p.shape[1] + wob_p.shape[1],
    }
    wslab = jnp.concatenate([wqkv_p, wob_p, w2_p], axis=1).astype(bf16)

    b1_p = _pad_cols(params["b1"].astype(f32))
    bqkv_p, bgru_p, b2_pp = _pad_cols(bqkvx), _pad_cols(bgru), _pad_cols(b2p)
    off.update({
        "b1": 0,
        "bqkv": b1_p.shape[1],
        "bgru": b1_p.shape[1] + bqkv_p.shape[1],
        "b2": b1_p.shape[1] + bqkv_p.shape[1] + bgru_p.shape[1],
    })
    bias_all = jnp.concatenate([b1_p, bqkv_p, bgru_p, b2_pp], axis=1)  # f32

    # ---------- data layout: collapse (batch, agents) to rows ----------------
    rows = b * a
    tb, n_tiles = _choose_tile(b, a)
    b_pad = tb * n_tiles
    rows_pad = b_pad * a
    tr = tb * a                                   # rows per grid step

    x_rows = _pad_rows(inputs.reshape(rows, e).astype(bf16), rows_pad)
    h_rows = _pad_rows(hidden_state.reshape(rows, H).astype(f32), rows_pad)

    # PyTorch: attn_mask = drop_inputs.repeat(4,1,1).bool() -> (4b, a, a); MHA
    # applies mask row m to (batch = m // 4, head = m % 4), so batch bb / head
    # h gets drop_inputs[(bb*4 + h) % b].  tile+reshape reproduces exactly
    # that mapping.  Shipped as int8 rows: row = (batch, query-agent),
    # column = head*a + key-agent.
    mask_bh = jnp.tile(drop_inputs.astype(jnp.int8), (NUM_HEADS, 1, 1)).reshape(
        b, NUM_HEADS, a, a)
    mask_rows = _pad_rows(
        jnp.transpose(mask_bh, (0, 2, 1, 3)).reshape(rows, NUM_HEADS * a),
        rows_pad)

    weights = [params["w1"].astype(bf16), wslab, wgru.astype(bf16), bias_all]

    in_specs = [
        pl.BlockSpec((tr, e), lambda i: (i, 0)),
        pl.BlockSpec((tr, H), lambda i: (i, 0)),
        pl.BlockSpec((tr, NUM_HEADS * a), lambda i: (i, 0)),
    ] + [pl.BlockSpec(w.shape, lambda i: (0, 0)) for w in weights]

    out_specs = pl.BlockSpec((tr, slab), lambda i: (i, 0))

    kernel = _make_kernel(H, a, qcols, off)

    out_slab = pl.pallas_call(
        kernel,
        out_shape=jax.ShapeDtypeStruct((rows_pad, slab), f32),
        grid_spec=pltpu.PrefetchScalarGridSpec(
            num_scalar_prefetch=0,
            grid=(n_tiles,),
            in_specs=in_specs,
            out_specs=out_specs,
        ),
        compiler_params=pltpu.CompilerParams(
            dimension_semantics=("parallel",)),
    )(x_rows, h_rows, mask_rows, *weights)

    hh = out_slab[:rows, :H].reshape(b, a, H)
    q = out_slab[:rows, H:H + nact].reshape(b, a, nact)
    return q, hh


# ---------------------------------------------------------------------------
# Pure-JAX reference (f32) for a loose sanity check of the kernel.
# ---------------------------------------------------------------------------
def _reference_forward(inputs, hidden_state, drop_inputs, params):
    b, a, e = inputs.shape
    H = params["w1"].shape[1]
    hd = H // NUM_HEADS
    x = jax.nn.relu(inputs @ params["w1"] + params["b1"])
    qkv = x @ params["win"] + params["bin"]
    q, k, v = qkv[..., :H], qkv[..., H:2 * H], qkv[..., 2 * H:]
    mask = jnp.tile(drop_inputs.astype(bool), (NUM_HEADS, 1, 1)).reshape(
        b, NUM_HEADS, a, a)
    outs = []
    for h in range(NUM_HEADS):
        qh = q[..., h * hd:(h + 1) * hd] / math.sqrt(hd)
        kh = k[..., h * hd:(h + 1) * hd]
        vh = v[..., h * hd:(h + 1) * hd]
        s = jnp.einsum('bqd,bkd->bqk', qh, kh)
        s = jnp.where(mask[:, h], -1e30, s)
        p = jax.nn.softmax(s, axis=-1)
        outs.append(jnp.einsum('bqk,bkd->bqd', p, vh))
    x_att = jnp.concatenate(outs, axis=-1) @ params["wout"] + params["bout"]
    x2 = jax.nn.relu(jnp.concatenate([x, x_att], axis=-1) @ params["watt"]
                     + params["batt"]).reshape(-1, H)
    h_in = hidden_state.reshape(-1, H)
    gi = x2 @ params["wih"] + params["bih"]
    gh = h_in @ params["whh"] + params["bhh"]
    r = jax.nn.sigmoid(gi[:, :H] + gh[:, :H])
    z = jax.nn.sigmoid(gi[:, H:2 * H] + gh[:, H:2 * H])
    n = jnp.tanh(gi[:, 2 * H:] + r * gh[:, 2 * H:])
    hh = (1.0 - z) * n + z * h_in
    q_out = hh @ params["w2"] + params["b2"]
    return q_out.reshape(b, a, -1), hh.reshape(b, a, H)


def _uniform(key, shape, fan_in):
    bound = 1.0 / math.sqrt(fan_in)
    return jax.random.uniform(key, shape, jnp.float32, -bound, bound)


def make_params(key, input_shape, hidden_dim, n_actions):
    H = hidden_dim
    ks = jax.random.split(key, 14)
    return {
        "w1":   _uniform(ks[0], (input_shape, H), input_shape),
        "b1":   _uniform(ks[1], (1, H), input_shape),
        "win":  _uniform(ks[2], (H, 3 * H), H),
        "bin":  _uniform(ks[3], (1, 3 * H), H),
        "wout": _uniform(ks[4], (H, H), H),
        "bout": _uniform(ks[5], (1, H), H),
        "watt": _uniform(ks[6], (2 * H, H), 2 * H),
        "batt": _uniform(ks[7], (1, H), 2 * H),
        "wih":  _uniform(ks[8], (H, 3 * H), H),
        "bih":  _uniform(ks[9], (1, 3 * H), H),
        "whh":  _uniform(ks[10], (H, 3 * H), H),
        "bhh":  _uniform(ks[11], (1, 3 * H), H),
        "w2":   _uniform(ks[12], (H, n_actions), H),
        "b2":   _uniform(ks[13], (1, n_actions), H),
    }


if __name__ == "__main__":
    b, a, e = 2, 4, 16          # batch, n_agents, input_shape
    H, n_actions = 32, 6        # rnn_hidden_dim, n_actions

    root = jax.random.PRNGKey(0)
    k_par, k_in, k_h, k_drop = jax.random.split(root, 4)

    params = make_params(k_par, e, H, n_actions)
    inputs = jax.random.normal(k_in, (b, a, e), jnp.float32)
    hidden_state = 0.1 * jax.random.normal(k_h, (b, a, H), jnp.float32)
    drop_inputs = jax.random.bernoulli(k_drop, 0.3, (b, a, a))
    drop_inputs = jnp.logical_and(drop_inputs, ~jnp.eye(a, dtype=bool)[None])

    q, hh = nrnn_agent_forward(inputs, hidden_state, drop_inputs, params)
    jax.block_until_ready((q, hh))

    assert q.shape == (b, a, n_actions) and hh.shape == (b, a, H)
    assert bool(jnp.all(jnp.isfinite(q))) and bool(jnp.all(jnp.isfinite(hh)))

    # loose correctness check against a pure-JAX f32 reference (kernel matmuls
    # run with bf16 operands / f32 accumulation, approx reciprocal in softmax)
    q_ref, hh_ref = _reference_forward(inputs, hidden_state, drop_inputs, params)
    assert float(jnp.max(jnp.abs(q - q_ref))) < 0.2
    assert float(jnp.max(jnp.abs(hh - hh_ref))) < 0.2

    print("KERNEL_OK")
</pallas_src>

<mosaic_0001>
module attributes {stable_mosaic.version = 11 : i64} {
  func.func @kernel(%arg0: i32, %arg1: memref<8x16xbf16, #tpu.memory_space<vmem>>, %arg2: memref<8x32xf32, #tpu.memory_space<vmem>>, %arg3: memref<8x16xi8, #tpu.memory_space<vmem>>, %arg4: memref<16x32xbf16, #tpu.memory_space<vmem>>, %arg5: memref<32x384xbf16, #tpu.memory_space<vmem>>, %arg6: memref<64x128xbf16, #tpu.memory_space<vmem>>, %arg7: memref<1x512xf32, #tpu.memory_space<vmem>>, %arg8: memref<8x128xf32, #tpu.memory_space<vmem>>) attributes {dimension_semantics = [#tpu.dimension_semantics<parallel>], iteration_bounds = array<i64: 1>, scalar_prefetch = 0 : i64, scratch_operands = 0 : i64, tpu.core_type = #tpu.core_type<tc>, window_params = [{transform_indices = @transform_0, window_bounds = array<i64: 8, 16>}, {transform_indices = @transform_1, window_bounds = array<i64: 8, 32>}, {transform_indices = @transform_2, window_bounds = array<i64: 8, 16>}, {pipeline_mode = #tpu.pipeline_mode<synchronous>, transform_indices = @transform_3, window_bounds = array<i64: 16, 32>}, {pipeline_mode = #tpu.pipeline_mode<synchronous>, transform_indices = @transform_4, window_bounds = array<i64: 32, 384>}, {pipeline_mode = #tpu.pipeline_mode<synchronous>, transform_indices = @transform_5, window_bounds = array<i64: 64, 128>}, {pipeline_mode = #tpu.pipeline_mode<synchronous>, transform_indices = @transform_6, window_bounds = array<i64: 1, 512>}, {transform_indices = @transform_7, window_bounds = array<i64: 8, 128>}]} {
    %c0 = arith.constant 0 : index
    %c0_0 = arith.constant 0 : index
    %0 = vector.load %arg7[%c0, %c0_0] : memref<1x512xf32, #tpu.memory_space<vmem>>, vector<1x32xf32>
    %c0_1 = arith.constant 0 : index
    %c128 = arith.constant 128 : index
    %1 = vector.load %arg7[%c0_1, %c128] : memref<1x512xf32, #tpu.memory_space<vmem>>, vector<1x128xf32>
    %c0_2 = arith.constant 0 : index
    %c256 = arith.constant 256 : index
    %2 = vector.load %arg7[%c0_2, %c256] : memref<1x512xf32, #tpu.memory_space<vmem>>, vector<1x128xf32>
    %c0_3 = arith.constant 0 : index
    %c384 = arith.constant 384 : index
    %3 = vector.load %arg7[%c0_3, %c384] : memref<1x512xf32, #tpu.memory_space<vmem>>, vector<1x96xf32>
    %c0_4 = arith.constant 0 : index
    %c0_5 = arith.constant 0 : index
    %4 = vector.load %arg5[%c0_4, %c0_5] : memref<32x384xbf16, #tpu.memory_space<vmem>>, vector<32x128xbf16>
    %c0_6 = arith.constant 0 : index
    %c128_7 = arith.constant 128 : index
    %5 = vector.load %arg5[%c0_6, %c128_7] : memref<32x384xbf16, #tpu.memory_space<vmem>>, vector<32x32xbf16>
    %c0_8 = arith.constant 0 : index
    %c256_9 = arith.constant 256 : index
    %6 = vector.load %arg5[%c0_8, %c256_9] : memref<32x384xbf16, #tpu.memory_space<vmem>>, vector<32x96xbf16>
    %c0_10 = arith.constant 0 : index
    %c0_11 = arith.constant 0 : index
    %7 = vector.load %arg1[%c0_10, %c0_11] : memref<8x16xbf16, #tpu.memory_space<vmem>>, vector<8x16xbf16>
    %c0_12 = arith.constant 0 : index
    %c0_13 = arith.constant 0 : index
    %8 = vector.load %arg4[%c0_12, %c0_13] : memref<16x32xbf16, #tpu.memory_space<vmem>>, vector<16x32xbf16>
    %cst = arith.constant dense<0.000000e+00> : vector<8x32xf32>
    %9 = tpu.matmul %7, %8, %cst {dimension_numbers = #tpu.dot_dimension_numbers<[1], [0], [0], [1], [0, 0, 1, 1], [], []>} : vector<8x16xbf16>, vector<16x32xbf16>, vector<8x32xf32> -> vector<8x32xf32>
    %10 = vector.broadcast %0 : vector<1x32xf32> to vector<8x32xf32>
    %11 = arith.addf %9, %10 : vector<8x32xf32>
    %cst_14 = arith.constant 0.000000e+00 : f32
    %12 = vector.broadcast %cst_14 : f32 to vector<8x32xf32>
    %13 = arith.maximumf %11, %12 : vector<8x32xf32>
    %14 = arith.truncf %13 : vector<8x32xf32> to vector<8x32xbf16>
    %cst_15 = arith.constant dense<0.000000e+00> : vector<8x128xf32>
    %15 = tpu.matmul %14, %4, %cst_15 {dimension_numbers = #tpu.dot_dimension_numbers<[1], [0], [0], [1], [0, 0, 1, 1], [], []>} : vector<8x32xbf16>, vector<32x128xbf16>, vector<8x128xf32> -> vector<8x128xf32>
    %16 = vector.broadcast %1 : vector<1x128xf32> to vector<8x128xf32>
    %17 = arith.addf %15, %16 : vector<8x128xf32>
    %18 = vector.extract_strided_slice %17 {offsets = [0, 96], sizes = [8, 32], strides = [1, 1]} : vector<8x128xf32> to vector<8x32xf32>
    %19 = vector.extract_strided_slice %17 {offsets = [0, 0], sizes = [8, 96], strides = [1, 1]} : vector<8x128xf32> to vector<8x96xf32>
    %20 = vector.shape_cast %19 : vector<8x96xf32> to vector<2x4x96xf32>
    %c0_16 = arith.constant 0 : index
    %c0_17 = arith.constant 0 : index
    %21 = vector.load %arg3[%c0_16, %c0_17] : memref<8x16xi8, #tpu.memory_space<vmem>>, vector<8x16xi8>
    %22 = arith.sitofp %21 : vector<8x16xi8> to vector<8x16xf32>
    %cst_18 = arith.constant -1.000000e+30 : f32
    %23 = vector.broadcast %cst_18 : f32 to vector<8x16xf32>
    %24 = arith.mulf %22, %23 : vector<8x16xf32>
    %25 = vector.extract_strided_slice %20 {offsets = [0, 0, 0], sizes = [2, 4, 8], strides = [1, 1, 1]} : vector<2x4x96xf32> to vector<2x4x8xf32>
    %26 = arith.truncf %25 : vector<2x4x8xf32> to vector<2x4x8xbf16>
    %27 = vector.extract_strided_slice %20 {offsets = [0, 0, 32], sizes = [2, 4, 8], strides = [1, 1, 1]} : vector<2x4x96xf32> to vector<2x4x8xf32>
    %28 = arith.truncf %27 : vector<2x4x8xf32> to vector<2x4x8xbf16>
    %29 = vector.extract_strided_slice %20 {offsets = [0, 0, 64], sizes = [2, 4, 8], strides = [1, 1, 1]} : vector<2x4x96xf32> to vector<2x4x8xf32>
    %30 = arith.truncf %29 : vector<2x4x8xf32> to vector<2x4x8xbf16>
    "tpu.trace_start"() <{level = 10 : i32, message = "bqd,bkd->bqk"}> : () -> ()
    %cst_19 = arith.constant dense<0.000000e+00> : vector<2x4x4xf32>
    %31 = tpu.matmul %26, %28, %cst_19 {dimension_numbers = #tpu.dot_dimension_numbers<[2], [2], [1], [1], [0, 0, 0, 1, 1, 1], [0], [0]>} : vector<2x4x8xbf16>, vector<2x4x8xbf16>, vector<2x4x4xf32> -> vector<2x4x4xf32>
    "tpu.trace_stop"() : () -> ()
    %32 = vector.extract_strided_slice %24 {offsets = [0, 0], sizes = [8, 4], strides = [1, 1]} : vector<8x16xf32> to vector<8x4xf32>
    %33 = vector.shape_cast %32 : vector<8x4xf32> to vector<2x4x4xf32>
    %34 = arith.addf %31, %33 : vector<2x4x4xf32>
    %cst_20 = arith.constant dense<0xFF800000> : vector<2x4xf32>
    %35 = vector.multi_reduction <maximumf>, %34, %cst_20 [2] : vector<2x4x4xf32> to vector<2x4xf32>
    %36 = vector.shape_cast %35 : vector<2x4xf32> to vector<2x4x1xf32>
    %37 = vector.broadcast %36 : vector<2x4x1xf32> to vector<2x4x4xf32>
    %38 = arith.subf %34, %37 : vector<2x4x4xf32>
    %39 = math.exp %38 : vector<2x4x4xf32>
    %cst_21 = arith.constant dense<0.000000e+00> : vector<2x4xf32>
    %40 = vector.multi_reduction <add>, %39, %cst_21 [2] : vector<2x4x4xf32> to vector<2x4xf32>
    %41 = vector.shape_cast %40 : vector<2x4xf32> to vector<2x4x1xf32>
    %42 = tpu.reciprocal %41 {approx = true} : vector<2x4x1xf32> -> vector<2x4x1xf32>
    %43 = vector.broadcast %42 : vector<2x4x1xf32> to vector<2x4x4xf32>
    %44 = arith.mulf %39, %43 : vector<2x4x4xf32>
    %45 = arith.truncf %44 : vector<2x4x4xf32> to vector<2x4x4xbf16>
    "tpu.trace_start"() <{level = 10 : i32, message = "bqk,bkd->bqd"}> : () -> ()
    %cst_22 = arith.constant dense<0.000000e+00> : vector<2x4x8xf32>
    %46 = tpu.matmul %45, %30, %cst_22 {dimension_numbers = #tpu.dot_dimension_numbers<[2], [1], [1], [2], [0, 0, 0, 1, 1, 2], [0], [0]>} : vector<2x4x4xbf16>, vector<2x4x8xbf16>, vector<2x4x8xf32> -> vector<2x4x8xf32>
    "tpu.trace_stop"() : () -> ()
    %47 = vector.shape_cast %46 : vector<2x4x8xf32> to vector<8x8xf32>
    %48 = vector.extract_strided_slice %20 {offsets = [0, 0, 8], sizes = [2, 4, 8], strides = [1, 1, 1]} : vector<2x4x96xf32> to vector<2x4x8xf32>
    %49 = arith.truncf %48 : vector<2x4x8xf32> to vector<2x4x8xbf16>
    %50 = vector.extract_strided_slice %20 {offsets = [0, 0, 40], sizes = [2, 4, 8], strides = [1, 1, 1]} : vector<2x4x96xf32> to vector<2x4x8xf32>
    %51 = arith.truncf %50 : vector<2x4x8xf32> to vector<2x4x8xbf16>
    %52 = vector.extract_strided_slice %20 {offsets = [0, 0, 72], sizes = [2, 4, 8], strides = [1, 1, 1]} : vector<2x4x96xf32> to vector<2x4x8xf32>
    %53 = arith.truncf %52 : vector<2x4x8xf32> to vector<2x4x8xbf16>
    "tpu.trace_start"() <{level = 10 : i32, message = "bqd,bkd->bqk"}> : () -> ()
    %cst_23 = arith.constant dense<0.000000e+00> : vector<2x4x4xf32>
    %54 = tpu.matmul %49, %51, %cst_23 {dimension_numbers = #tpu.dot_dimension_numbers<[2], [2], [1], [1], [0, 0, 0, 1, 1, 1], [0], [0]>} : vector<2x4x8xbf16>, vector<2x4x8xbf16>, vector<2x4x4xf32> -> vector<2x4x4xf32>
    "tpu.trace_stop"() : () -> ()
    %55 = vector.extract_strided_slice %24 {offsets = [0, 4], sizes = [8, 4], strides = [1, 1]} : vector<8x16xf32> to vector<8x4xf32>
    %56 = vector.shape_cast %55 : vector<8x4xf32> to vector<2x4x4xf32>
    %57 = arith.addf %54, %56 : vector<2x4x4xf32>
    %cst_24 = arith.constant dense<0xFF800000> : vector<2x4xf32>
    %58 = vector.multi_reduction <maximumf>, %57, %cst_24 [2] : vector<2x4x4xf32> to vector<2x4xf32>
    %59 = vector.shape_cast %58 : vector<2x4xf32> to vector<2x4x1xf32>
    %60 = vector.broadcast %59 : vector<2x4x1xf32> to vector<2x4x4xf32>
    %61 = arith.subf %57, %60 : vector<2x4x4xf32>
    %62 = math.exp %61 : vector<2x4x4xf32>
    %cst_25 = arith.constant dense<0.000000e+00> : vector<2x4xf32>
    %63 = vector.multi_reduction <add>, %62, %cst_25 [2] : vector<2x4x4xf32> to vector<2x4xf32>
    %64 = vector.shape_cast %63 : vector<2x4xf32> to vector<2x4x1xf32>
    %65 = tpu.reciprocal %64 {approx = true} : vector<2x4x1xf32> -> vector<2x4x1xf32>
    %66 = vector.broadcast %65 : vector<2x4x1xf32> to vector<2x4x4xf32>
    %67 = arith.mulf %62, %66 : vector<2x4x4xf32>
    %68 = arith.truncf %67 : vector<2x4x4xf32> to vector<2x4x4xbf16>
    "tpu.trace_start"() <{level = 10 : i32, message = "bqk,bkd->bqd"}> : () -> ()
    %cst_26 = arith.constant dense<0.000000e+00> : vector<2x4x8xf32>
    %69 = tpu.matmul %68, %53, %cst_26 {dimension_numbers = #tpu.dot_dimension_numbers<[2], [1], [1], [2], [0, 0, 0, 1, 1, 2], [0], [0]>} : vector<2x4x4xbf16>, vector<2x4x8xbf16>, vector<2x4x8xf32> -> vector<2x4x8xf32>
    "tpu.trace_stop"() : () -> ()
    %70 = vector.shape_cast %69 : vector<2x4x8xf32> to vector<8x8xf32>
    %71 = vector.extract_strided_slice %20 {offsets = [0, 0, 16], sizes = [2, 4, 8], strides = [1, 1, 1]} : vector<2x4x96xf32> to vector<2x4x8xf32>
    %72 = arith.truncf %71 : vector<2x4x8xf32> to vector<2x4x8xbf16>
    %73 = vector.extract_strided_slice %20 {offsets = [0, 0, 48], sizes = [2, 4, 8], strides = [1, 1, 1]} : vector<2x4x96xf32> to vector<2x4x8xf32>
    %74 = arith.truncf %73 : vector<2x4x8xf32> to vector<2x4x8xbf16>
    %75 = vector.extract_strided_slice %20 {offsets = [0, 0, 80], sizes = [2, 4, 8], strides = [1, 1, 1]} : vector<2x4x96xf32> to vector<2x4x8xf32>
    %76 = arith.truncf %75 : vector<2x4x8xf32> to vector<2x4x8xbf16>
    "tpu.trace_start"() <{level = 10 : i32, message = "bqd,bkd->bqk"}> : () -> ()
    %cst_27 = arith.constant dense<0.000000e+00> : vector<2x4x4xf32>
    %77 = tpu.matmul %72, %74, %cst_27 {dimension_numbers = #tpu.dot_dimension_numbers<[2], [2], [1], [1], [0, 0, 0, 1, 1, 1], [0], [0]>} : vector<2x4x8xbf16>, vector<2x4x8xbf16>, vector<2x4x4xf32> -> vector<2x4x4xf32>
    "tpu.trace_stop"() : () -> ()
    %78 = vector.extract_strided_slice %24 {offsets = [0, 8], sizes = [8, 4], strides = [1, 1]} : vector<8x16xf32> to vector<8x4xf32>
    %79 = vector.shape_cast %78 : vector<8x4xf32> to vector<2x4x4xf32>
    %80 = arith.addf %77, %79 : vector<2x4x4xf32>
    %cst_28 = arith.constant dense<0xFF800000> : vector<2x4xf32>
    %81 = vector.multi_reduction <maximumf>, %80, %cst_28 [2] : vector<2x4x4xf32> to vector<2x4xf32>
    %82 = vector.shape_cast %81 : vector<2x4xf32> to vector<2x4x1xf32>
    %83 = vector.broadcast %82 : vector<2x4x1xf32> to vector<2x4x4xf32>
    %84 = arith.subf %80, %83 : vector<2x4x4xf32>
    %85 = math.exp %84 : vector<2x4x4xf32>
    %cst_29 = arith.constant dense<0.000000e+00> : vector<2x4xf32>
    %86 = vector.multi_reduction <add>, %85, %cst_29 [2] : vector<2x4x4xf32> to vector<2x4xf32>
    %87 = vector.shape_cast %86 : vector<2x4xf32> to vector<2x4x1xf32>
    %88 = tpu.reciprocal %87 {approx = true} : vector<2x4x1xf32> -> vector<2x4x1xf32>
    %89 = vector.broadcast %88 : vector<2x4x1xf32> to vector<2x4x4xf32>
    %90 = arith.mulf %85, %89 : vector<2x4x4xf32>
    %91 = arith.truncf %90 : vector<2x4x4xf32> to vector<2x4x4xbf16>
    "tpu.trace_start"() <{level = 10 : i32, message = "bqk,bkd->bqd"}> : () -> ()
    %cst_30 = arith.constant dense<0.000000e+00> : vector<2x4x8xf32>
    %92 = tpu.matmul %91, %76, %cst_30 {dimension_numbers = #tpu.dot_dimension_numbers<[2], [1], [1], [2], [0, 0, 0, 1, 1, 2], [0], [0]>} : vector<2x4x4xbf16>, vector<2x4x8xbf16>, vector<2x4x8xf32> -> vector<2x4x8xf32>
    "tpu.trace_stop"() : () -> ()
    %93 = vector.shape_cast %92 : vector<2x4x8xf32> to vector<8x8xf32>
    %94 = vector.extract_strided_slice %20 {offsets = [0, 0, 24], sizes = [2, 4, 8], strides = [1, 1, 1]} : vector<2x4x96xf32> to vector<2x4x8xf32>
    %95 = arith.truncf %94 : vector<2x4x8xf32> to vector<2x4x8xbf16>
    %96 = vector.extract_strided_slice %20 {offsets = [0, 0, 56], sizes = [2, 4, 8], strides = [1, 1, 1]} : vector<2x4x96xf32> to vector<2x4x8xf32>
    %97 = arith.truncf %96 : vector<2x4x8xf32> to vector<2x4x8xbf16>
    %98 = vector.extract_strided_slice %20 {offsets = [0, 0, 88], sizes = [2, 4, 8], strides = [1, 1, 1]} : vector<2x4x96xf32> to vector<2x4x8xf32>
    %99 = arith.truncf %98 : vector<2x4x8xf32> to vector<2x4x8xbf16>
    "tpu.trace_start"() <{level = 10 : i32, message = "bqd,bkd->bqk"}> : () -> ()
    %cst_31 = arith.constant dense<0.000000e+00> : vector<2x4x4xf32>
    %100 = tpu.matmul %95, %97, %cst_31 {dimension_numbers = #tpu.dot_dimension_numbers<[2], [2], [1], [1], [0, 0, 0, 1, 1, 1], [0], [0]>} : vector<2x4x8xbf16>, vector<2x4x8xbf16>, vector<2x4x4xf32> -> vector<2x4x4xf32>
    "tpu.trace_stop"() : () -> ()
    %101 = vector.extract_strided_slice %24 {offsets = [0, 12], sizes = [8, 4], strides = [1, 1]} : vector<8x16xf32> to vector<8x4xf32>
    %102 = vector.shape_cast %101 : vector<8x4xf32> to vector<2x4x4xf32>
    %103 = arith.addf %100, %102 : vector<2x4x4xf32>
    %cst_32 = arith.constant dense<0xFF800000> : vector<2x4xf32>
    %104 = vector.multi_reduction <maximumf>, %103, %cst_32 [2] : vector<2x4x4xf32> to vector<2x4xf32>
    %105 = vector.shape_cast %104 : vector<2x4xf32> to vector<2x4x1xf32>
    %106 = vector.broadcast %105 : vector<2x4x1xf32> to vector<2x4x4xf32>
    %107 = arith.subf %103, %106 : vector<2x4x4xf32>
    %108 = math.exp %107 : vector<2x4x4xf32>
    %cst_33 = arith.constant dense<0.000000e+00> : vector<2x4xf32>
    %109 = vector.multi_reduction <add>, %108, %cst_33 [2] : vector<2x4x4xf32> to vector<2x4xf32>
    %110 = vector.shape_cast %109 : vector<2x4xf32> to vector<2x4x1xf32>
    %111 = tpu.reciprocal %110 {approx = true} : vector<2x4x1xf32> -> vector<2x4x1xf32>
    %112 = vector.broadcast %111 : vector<2x4x1xf32> to vector<2x4x4xf32>
    %113 = arith.mulf %108, %112 : vector<2x4x4xf32>
    %114 = arith.truncf %113 : vector<2x4x4xf32> to vector<2x4x4xbf16>
    "tpu.trace_start"() <{level = 10 : i32, message = "bqk,bkd->bqd"}> : () -> ()
    %cst_34 = arith.constant dense<0.000000e+00> : vector<2x4x8xf32>
    %115 = tpu.matmul %114, %99, %cst_34 {dimension_numbers = #tpu.dot_dimension_numbers<[2], [1], [1], [2], [0, 0, 0, 1, 1, 2], [0], [0]>} : vector<2x4x4xbf16>, vector<2x4x8xbf16>, vector<2x4x8xf32> -> vector<2x4x8xf32>
    "tpu.trace_stop"() : () -> ()
    %116 = vector.shape_cast %115 : vector<2x4x8xf32> to vector<8x8xf32>
    %117 = tpu.concatenate %47, %70, %93, %116 in 1 : vector<8x8xf32>, vector<8x8xf32>, vector<8x8xf32>, vector<8x8xf32> -> vector<8x32xf32>
    %118 = arith.truncf %117 : vector<8x32xf32> to vector<8x32xbf16>
    %cst_35 = arith.constant dense<0.000000e+00> : vector<8x32xf32>
    %119 = tpu.matmul %118, %5, %cst_35 {dimension_numbers = #tpu.dot_dimension_numbers<[1], [0], [0], [1], [0, 0, 1, 1], [], []>} : vector<8x32xbf16>, vector<32x32xbf16>, vector<8x32xf32> -> vector<8x32xf32>
    %120 = arith.addf %18, %119 : vector<8x32xf32>
    %cst_36 = arith.constant 0.000000e+00 : f32
    %121 = vector.broadcast %cst_36 : f32 to vector<8x32xf32>
    %122 = arith.maximumf %120, %121 : vector<8x32xf32>
    %c0_37 = arith.constant 0 : index
    %c0_38 = arith.constant 0 : index
    %123 = vector.load %arg2[%c0_37, %c0_38] : memref<8x32xf32, #tpu.memory_space<vmem>>, vector<8x32xf32>
    %124 = tpu.concatenate %122, %123 in 1 : vector<8x32xf32>, vector<8x32xf32> -> vector<8x64xf32>
    %125 = arith.truncf %124 : vector<8x64xf32> to vector<8x64xbf16>
    %c0_39 = arith.constant 0 : index
    %c0_40 = arith.constant 0 : index
    %126 = vector.load %arg6[%c0_39, %c0_40] : memref<64x128xbf16, #tpu.memory_space<vmem>>, vector<64x128xbf16>
    %cst_41 = arith.constant dense<0.000000e+00> : vector<8x128xf32>
    %127 = tpu.matmul %125, %126, %cst_41 {dimension_numbers = #tpu.dot_dimension_numbers<[1], [0], [0], [1], [0, 0, 1, 1], [], []>} : vector<8x64xbf16>, vector<64x128xbf16>, vector<8x128xf32> -> vector<8x128xf32>
    %128 = vector.broadcast %2 : vector<1x128xf32> to vector<8x128xf32>
    %129 = arith.addf %127, %128 : vector<8x128xf32>
    %130 = vector.extract_strided_slice %129 {offsets = [0, 0], sizes = [8, 32], strides = [1, 1]} : vector<8x128xf32> to vector<8x32xf32>
    %131 = arith.negf %130 : vector<8x32xf32>
    %132 = math.exp %131 : vector<8x32xf32>
    %cst_42 = arith.constant 1.000000e+00 : f32
    %133 = vector.broadcast %cst_42 : f32 to vector<8x32xf32>
    %134 = arith.addf %133, %132 : vector<8x32xf32>
    %135 = arith.divf %133, %134 : vector<8x32xf32>
    %136 = vector.extract_strided_slice %129 {offsets = [0, 32], sizes = [8, 32], strides = [1, 1]} : vector<8x128xf32> to vector<8x32xf32>
    %137 = arith.negf %136 : vector<8x32xf32>
    %138 = math.exp %137 : vector<8x32xf32>
    %cst_43 = arith.constant 1.000000e+00 : f32
    %139 = vector.broadcast %cst_43 : f32 to vector<8x32xf32>
    %140 = arith.addf %139, %138 : vector<8x32xf32>
    %141 = arith.divf %139, %140 : vector<8x32xf32>
    %142 = vector.extract_strided_slice %129 {offsets = [0, 64], sizes = [8, 32], strides = [1, 1]} : vector<8x128xf32> to vector<8x32xf32>
    %143 = vector.extract_strided_slice %129 {offsets = [0, 96], sizes = [8, 32], strides = [1, 1]} : vector<8x128xf32> to vector<8x32xf32>
    %144 = arith.mulf %135, %143 : vector<8x32xf32>
    %145 = arith.addf %142, %144 : vector<8x32xf32>
    %146 = math.tanh %145 : vector<8x32xf32>
    %cst_44 = arith.constant 1.000000e+00 : f32
    %147 = vector.broadcast %cst_44 : f32 to vector<8x32xf32>
    %148 = arith.subf %147, %141 : vector<8x32xf32>
    %149 = arith.mulf %148, %146 : vector<8x32xf32>
    %150 = arith.mulf %141, %123 : vector<8x32xf32>
    %151 = arith.addf %149, %150 : vector<8x32xf32>
    %152 = arith.truncf %151 : vector<8x32xf32> to vector<8x32xbf16>
    %cst_45 = arith.constant dense<0.000000e+00> : vector<8x96xf32>
    %153 = tpu.matmul %152, %6, %cst_45 {dimension_numbers = #tpu.dot_dimension_numbers<[1], [0], [0], [1], [0, 0, 1, 1], [], []>} : vector<8x32xbf16>, vector<32x96xbf16>, vector<8x96xf32> -> vector<8x96xf32>
    %154 = vector.broadcast %3 : vector<1x96xf32> to vector<8x96xf32>
    %155 = arith.addf %153, %154 : vector<8x96xf32>
    %156 = tpu.concatenate %151, %155 in 1 : vector<8x32xf32>, vector<8x96xf32> -> vector<8x128xf32>
    %c0_46 = arith.constant 0 : index
    %c0_47 = arith.constant 0 : index
    %157 = vector.load %arg8[%c0_46, %c0_47] : memref<8x128xf32, #tpu.memory_space<vmem>>, vector<8x128xf32>
    tpu.vector_store %arg8[%c0_46, %c0_47], %156 {strides = array<i32>} : memref<8x128xf32, #tpu.memory_space<vmem>>, vector<8x128xf32>,
    return
  }
  func.func @transform_0(%arg0: i32) -> (i32, i32) {
    %c0_i32 = arith.constant 0 : i32
    %c0_i32_0 = arith.constant 0 : i32
    return %arg0, %c0_i32 : i32, i32
  }
  func.func @transform_1(%arg0: i32) -> (i32, i32) {
    %c0_i32 = arith.constant 0 : i32
    %c0_i32_0 = arith.constant 0 : i32
    return %arg0, %c0_i32 : i32, i32
  }
  func.func @transform_2(%arg0: i32) -> (i32, i32) {
    %c0_i32 = arith.constant 0 : i32
    %c0_i32_0 = arith.constant 0 : i32
    return %arg0, %c0_i32 : i32, i32
  }
  func.func @transform_3(%arg0: i32) -> (i32, i32) {
    %c0_i32 = arith.constant 0 : i32
    %c0_i32_0 = arith.constant 0 : i32
    %c0_i32_1 = arith.constant 0 : i32
    return %c0_i32, %c0_i32_0 : i32, i32
  }
  func.func @transform_4(%arg0: i32) -> (i32, i32) {
    %c0_i32 = arith.constant 0 : i32
    %c0_i32_0 = arith.constant 0 : i32
    %c0_i32_1 = arith.constant 0 : i32
    return %c0_i32, %c0_i32_0 : i32, i32
  }
  func.func @transform_5(%arg0: i32) -> (i32, i32) {
    %c0_i32 = arith.constant 0 : i32
    %c0_i32_0 = arith.constant 0 : i32
    %c0_i32_1 = arith.constant 0 : i32
    return %c0_i32, %c0_i32_0 : i32, i32
  }
  func.func @transform_6(%arg0: i32) -> (i32, i32) {
    %c0_i32 = arith.constant 0 : i32
    %c0_i32_0 = arith.constant 0 : i32
    %c0_i32_1 = arith.constant 0 : i32
    return %c0_i32, %c0_i32_0 : i32, i32
  }
  func.func @transform_7(%arg0: i32) -> (i32, i32) {
    %c0_i32 = arith.constant 0 : i32
    %c0_i32_0 = arith.constant 0 : i32
    return %arg0, %c0_i32 : i32, i32
  }
}

</mosaic_0001>

<llo_original>
// kernel: tpu_custom_call.1
$region0: #{tpu_custom_call.1}
  #allocation0 [shape = 'u32[]', space=smem, size = 0x4, offset = 0x4, fixed_abs, tag = 'smem constant byte address 0x4 - core index']
  #allocation1 [shape = 'u32[144,128]{1,0:T(1,128)}', space=vmem, size = 0x12000, scoped, tag = 'internal scratch']
  %s0 = inlined_call_operand.hbm [shape: bf16[8,16], index: 0, kind: input, shape index: {}]
  %s1 = inlined_call_operand.hbm [shape: f32[8,32], index: 1, kind: input, shape index: {}]
  %s2 = inlined_call_operand.vmem [shape: s8[8,16], index: 2, kind: input, shape index: {}]
  %s3 = inlined_call_operand.vmem [shape: bf16[16,32], index: 3, kind: input, shape index: {}]
  %s4 = inlined_call_operand.hbm [shape: bf16[32,384], index: 4, kind: input, shape index: {}]
  %s5 = inlined_call_operand.hbm [shape: bf16[64,128], index: 5, kind: input, shape index: {}]
  %s6 = inlined_call_operand.vmem [shape: f32[1,512], index: 6, kind: input, shape index: {}]
  %s7 = inlined_call_operand.hbm [shape: f32[8,128], index: 7, kind: output, shape index: {}]
  %s8 = sld [smem:[#allocation0]]
  $region54: #{tpu_custom_call.1} parent=0
    _
  %s10 = ssub.s32 1, %s8
  %s11 = scalar_select 0, %s10, %s8
  $region1: #{tpu_custom_call.1} parent=0
    #allocation2 [shape = 'u8[2048]{0}', space=vmem, size = 0x800, scoped, tag = 'input window, operand 0, single buffered']
    #allocation3 [shape = 's32[1]{0}', space=sflag, size = 0x4, scoped, tag = 'scoped memory for tpu_custom_call.1']
    #allocation4 [shape = 's32[1]{0}', space=sflag, size = 0x4, scoped, tag = 'scoped memory for tpu_custom_call.1']
    #allocation5 [shape = 'u8[4096]{0}', space=vmem, size = 0x1000, scoped, tag = 'input window, operand 1, single buffered']
    #allocation6 [shape = 's32[1]{0}', space=sflag, size = 0x4, scoped, tag = 'scoped memory for tpu_custom_call.1']
    #allocation7 [shape = 'u8[24576]{0}', space=vmem, size = 0x6000, scoped, tag = 'input window, operand 4, single buffered']
    #allocation8 [shape = 'u8[16384]{0}', space=vmem, size = 0x4000, scoped, tag = 'input window, operand 5, single buffered']
    #allocation9 [shape = 's32[1]{0}', space=sflag, size = 0x4, scoped, tag = 'scoped memory for tpu_custom_call.1']
    #allocation10 [shape = 'u8[4096]{0}', space=vmem, size = 0x1000, scoped, tag = 'output window, operand 0, single buffered']
    %12 = vsyncpa [#allocation3], 0
    %13 = vsyncpa [#allocation6], 0
    %14 = vsyncpa [#allocation9], 0
    %15 = vsyncpa [#allocation4], 0
    // Predicated region
    $region2: #{tpu_custom_call.1} parent=1 // pred_check
      _
    $region3: #{tpu_custom_call.1} parent=1 // pred_check_branch
      %17 = sbr.rel (0) target = $region5
    $region4: #{tpu_custom_call.1} parent=1 // pred_region
      %s19 = ssub.s32 64, 64
      %20 = vsyncadd [#allocation3], %s19
      %s22 = sshll.u32 [#allocation2], 4
      %s23 = int_to_ptr.vmem [resolvable:$true] %s22
      %25 = dma.hbm_to_vmem [thread:$0]  %s0, 64, %s23, [#allocation3]
    $region5: #{tpu_custom_call.1} parent=1 // pred_fallthru
      _
    // Predicated region
    $region6: #{tpu_custom_call.1} parent=1 // pred_check
      _
    $region7: #{tpu_custom_call.1} parent=1 // pred_check_branch
      %27 = sbr.rel (0) target = $region9
    $region8: #{tpu_custom_call.1} parent=1 // pred_region
      %s29 = ssub.s32 128, 128
      %30 = vsyncadd [#allocation6], %s29
      %s32 = sshll.u32 [#allocation5], 4
      %s33 = int_to_ptr.vmem [resolvable:$true] %s32
      %35 = dma.hbm_to_vmem [thread:$0]  %s1, 128, %s33, [#allocation6]
    $region9: #{tpu_custom_call.1} parent=1 // pred_fallthru
      _
    // Predicated region
    $region10: #{tpu_custom_call.1} parent=1 // pred_check
      _
    $region11: #{tpu_custom_call.1} parent=1 // pred_check_branch
      %37 = sbr.rel (0) target = $region13
    $region12: #{tpu_custom_call.1} parent=1 // pred_region
      _
    $region13: #{tpu_custom_call.1} parent=1 // pred_fallthru
      _
    // Predicated region
    $region14: #{tpu_custom_call.1} parent=1 // pred_check
      _
    $region15: #{tpu_custom_call.1} parent=1 // pred_check_branch
      %39 = sbr.rel (0) target = $region17
    $region16: #{tpu_custom_call.1} parent=1 // pred_region
      _
    $region17: #{tpu_custom_call.1} parent=1 // pred_fallthru
      _
    // Predicated region
    $region18: #{tpu_custom_call.1} parent=1 // pred_check
      _
    $region19: #{tpu_custom_call.1} parent=1 // pred_check_branch
      %41 = sbr.rel (0) target = $region21
    $region20: #{tpu_custom_call.1} parent=1 // pred_region
      %s43 = ssub.s32 768, 768
      %44 = vsyncadd [#allocation6], %s43
      %s45 = sshll.u32 [#allocation7], 4
      %s46 = int_to_ptr.vmem [resolvable:$true] %s45
      %51 = dma.hbm_to_vmem [thread:$0]  %s4, 768, %s46, [#allocation6], 192, 192, 12
    $region21: #{tpu_custom_call.1} parent=1 // pred_fallthru
      _
    // Predicated region
    $region22: #{tpu_custom_call.1} parent=1 // pred_check
      _
    $region23: #{tpu_custom_call.1} parent=1 // pred_check_branch
      %53 = sbr.rel (0) target = $region25
    $region24: #{tpu_custom_call.1} parent=1 // pred_region
      %s55 = ssub.s32 512, 512
      %56 = vsyncadd [#allocation9], %s55
      %s57 = sshll.u32 [#allocation8], 4
      %s58 = int_to_ptr.vmem [resolvable:$true] %s57
      %63 = dma.hbm_to_vmem [thread:$0]  %s5, 512, %s58, [#allocation9], 64, 64, 4
    $region25: #{tpu_custom_call.1} parent=1 // pred_fallthru
      _
    // Predicated region
    $region26: #{tpu_custom_call.1} parent=1 // pred_check
      _
    $region27: #{tpu_custom_call.1} parent=1 // pred_check_branch
      %65 = sbr.rel (0) target = $region29
    $region28: #{tpu_custom_call.1} parent=1 // pred_region
      _
    $region29: #{tpu_custom_call.1} parent=1 // pred_fallthru
      _
    // Predicated region
    $region30: #{tpu_custom_call.1} parent=1 // pred_check
      _
    $region31: #{tpu_custom_call.1} parent=1 // pred_check_branch
      %67 = sbr.rel (0) target = $region33
    $region32: #{tpu_custom_call.1} parent=1 // pred_region
      %68 = dma.done [#allocation3], 64
    $region33: #{tpu_custom_call.1} parent=1 // pred_fallthru
      _
    // Predicated region
    $region34: #{tpu_custom_call.1} parent=1 // pred_check
      _
    $region35: #{tpu_custom_call.1} parent=1 // pred_check_branch
      %70 = sbr.rel (0) target = $region37
    $region36: #{tpu_custom_call.1} parent=1 // pred_region
      %71 = dma.done [#allocation6], 128
    $region37: #{tpu_custom_call.1} parent=1 // pred_fallthru
      _
    // Predicated region
    $region38: #{tpu_custom_call.1} parent=1 // pred_check
      _
    $region39: #{tpu_custom_call.1} parent=1 // pred_check_branch
      %73 = sbr.rel (0) target = $region41
    $region40: #{tpu_custom_call.1} parent=1 // pred_region
      %74 = dma.done [#allocation6], 768
    $region41: #{tpu_custom_call.1} parent=1 // pred_fallthru
      _
    // Predicated region
    $region42: #{tpu_custom_call.1} parent=1 // pred_check
      _
    $region43: #{tpu_custom_call.1} parent=1 // pred_check_branch
      %76 = sbr.rel (0) target = $region45
    $region44: #{tpu_custom_call.1} parent=1 // pred_region
      %77 = dma.done [#allocation9], 512
    $region45: #{tpu_custom_call.1} parent=1 // pred_fallthru
      _
    %v79 = vld [vmem:[%s6] sm:$0x1]
    %v80 = vld [vmem:[%s6 + $0x1] sm:$0x1]
    %v81 = vld [vmem:[%s6 + $0x2] sm:$0x1]
    %v82 = vld [vmem:[%s6 + $0x3] sm:$0x1]
    %v83 = vld [vmem:[#allocation7] sm:$0xf]
    %v84 = vld [vmem:[#allocation7 + $0xc] sm:$0xf]
    %v85 = vld [vmem:[#allocation7 + $0x18] sm:$0xf]
    %v86 = vld [vmem:[#allocation7 + $0x24] sm:$0xf]
    %v87 = vld [vmem:[#allocation7 + $0x4] sm:$0xf]
    %v88 = vld [vmem:[#allocation7 + $0x10] sm:$0xf]
    %v89 = vld [vmem:[#allocation7 + $0x1c] sm:$0xf]
    %v90 = vld [vmem:[#allocation7 + $0x28] sm:$0xf]
    %v91 = vld [vmem:[#allocation7 + $0x8] sm:$0xf]
    %v92 = vld [vmem:[#allocation7 + $0x14] sm:$0xf]
    %v93 = vld [vmem:[#allocation7 + $0x20] sm:$0xf]
    %v94 = vld [vmem:[#allocation7 + $0x2c] sm:$0xf]
    %v95 = vld [vmem:[#allocation2] sm:$0xf]
    %v96 = vld [vmem:[%s3] sm:$0xf]
    %v97 = vld [vmem:[%s3 + $0x4] sm:$0xf]
    %v99 = vlaneseq
    %v100 = vshrl.u32 %v99, 7
    %v101 = vsub.s32 0, %v100
    %v102 = vrot.slane %v79, %v101
    %v106 = vunpack.c.l.b16 %v96
    %v107 = vunpack.c.l.b16 %v97
    %v108 = vpack.c.b16 %v107, %v106
    %vm110 = vcmask 130048
    %v112 = vsel %vm110, %v95, 0
    %114 = vmatprep.subr.bf16.mxu0 0
    %115 = vmatpush1.bf16.msra.mxu0 %v108
    %116 = vmatprep.subr.bf16.mxu0 0
    %117 = vmatpush1.bf16.msra.mxu0 0
    %118 = vmatprep.subr.bf16.mxu0 0
    %119 = vmatpush1.bf16.msra.mxu0 0
    %120 = vmatprep.subr.bf16.mxu0 0
    %121 = vmatpush1.bf16.msra.mxu0 0
    %122 = vmatprep.subr.bf16.mxu0 0
    %123 = vmatpush1.bf16.msra.mxu0 0
    %124 = vmatprep.subr.bf16.mxu0 0
    %125 = vmatpush1.bf16.msra.mxu0 0
    %126 = vmatprep.subr.bf16.mxu0 0
    %127 = vmatpush1.bf16.msra.mxu0 0
    %128 = vmatprep.subr.bf16.mxu0 0
    %129 = vmatpush1.bf16.msra.mxu0 0
    %130 = vmatprep.subr.bf16.mxu0 0
    %131 = vmatpush1.bf16.msra.mxu0 0
    %132 = vmatprep.subr.bf16.mxu0 0
    %133 = vmatpush1.bf16.msra.mxu0 0
    %134 = vmatprep.subr.bf16.mxu0 0
    %135 = vmatpush1.bf16.msra.mxu0 0
    %136 = vmatprep.subr.bf16.mxu0 0
    %137 = vmatpush1.bf16.msra.mxu0 0
    %138 = vmatprep.subr.bf16.mxu0 0
    %139 = vmatpush1.bf16.msra.mxu0 0
    %140 = vmatprep.subr.bf16.mxu0 0
    %141 = vmatpush1.bf16.msra.mxu0 0
    %142 = vmatprep.subr.bf16.mxu0 0
    %143 = vmatpush1.bf16.msra.mxu0 0
    %144 = vmatprep.subr.bf16.mxu0 0
    %145 = vmatpush1.bf16.msra.mxu0 0
    %146 = vmatprep.mubr.bf16.mxu0 0
    %147 = vmatmul.mubr.bf16.gmra.mrb[0].mxu0 %v112
    %v148 = vpop.f32.mrb[0].mxu0
    %v149 = vadd.f32 %v102, %v148
    %v150 = vpop.f32.mrb[0].mxu0
    %v151 = vpop.f32.mrb[0].mxu0
    %v152 = vpop.f32.mrb[0].mxu0
    %153 = vdwg.mxu0
    %v154 = vmax.f32 %v149, 0.0
    %v155 = vpack.c.bf16 %v154, %v154
    %v157 = vlaneseq
    %v158 = vshrl.u32 %v157, 7
    %v159 = vsub.s32 0, %v158
    %v160 = vrot.slane %v80, %v159
    %v166 = vunpack.c.l.b16 %v83
    %v167 = vunpack.c.l.b16 %v84
    %v168 = vunpack.c.l.b16 %v85
    %v169 = vunpack.c.l.b16 %v86
    %v170 = vpack.c.b16 %v167, %v166
    %v171 = vpack.c.b16 %v169, %v168
    %vm174 = vcmask 261120
    %v176 = vsel %vm174, %v155, 0
    %178 = vmatprep.subr.bf16.mxu0 0
    %179 = vmatpush1.bf16.msra.mxu0 %v170
    %180 = vmatprep.subr.bf16.mxu0 0
    %181 = vmatpush1.bf16.msra.mxu0 %v171
    %182 = vmatprep.subr.bf16.mxu0 0
    %183 = vmatpush1.bf16.msra.mxu0 0
    %184 = vmatprep.subr.bf16.mxu0 0
    %185 = vmatpush1.bf16.msra.mxu0 0
    %186 = vmatprep.subr.bf16.mxu0 0
    %187 = vmatpush1.bf16.msra.mxu0 0
    %188 = vmatprep.subr.bf16.mxu0 0
    %189 = vmatpush1.bf16.msra.mxu0 0
    %190 = vmatprep.subr.bf16.mxu0 0
    %191 = vmatpush1.bf16.msra.mxu0 0
    %192 = vmatprep.subr.bf16.mxu0 0
    %193 = vmatpush1.bf16.msra.mxu0 0
    %194 = vmatprep.subr.bf16.mxu0 0
    %195 = vmatpush1.bf16.msra.mxu0 0
    %196 = vmatprep.subr.bf16.mxu0 0
    %197 = vmatpush1.bf16.msra.mxu0 0
    %198 = vmatprep.subr.bf16.mxu0 0
    %199 = vmatpush1.bf16.msra.mxu0 0
    %200 = vmatprep.subr.bf16.mxu0 0
    %201 = vmatpush1.bf16.msra.mxu0 0
    %202 = vmatprep.subr.bf16.mxu0 0
    %203 = vmatpush1.bf16.msra.mxu0 0
    %204 = vmatprep.subr.bf16.mxu0 0
    %205 = vmatpush1.bf16.msra.mxu0 0
    %206 = vmatprep.subr.bf16.mxu0 0
    %207 = vmatpush1.bf16.msra.mxu0 0
    %208 = vmatprep.subr.bf16.mxu0 0
    %209 = vmatpush1.bf16.msra.mxu0 0
    %210 = vmatprep.mubr.bf16.mxu0 0
    %211 = vmatmul.mubr.bf16.gmra.mrb[0].mxu0 %v176
    %v212 = vpop.f32.mrb[0].mxu0
    %v213 = vadd.f32 %v160, %v212
    %v214 = vpop.f32.mrb[0].mxu0
    %v215 = vpop.f32.mrb[0].mxu0
    %v216 = vpop.f32.mrb[0].mxu0
    %217 = vdwg.mxu0
    %v219 = vcombine.high %v213, %v213
    %v221 = vld [vmem:[%s2] sm:$0x3]
    %v222 = vunpack.c.0.s8 %v221
    %v223 = vcvt.s32.f32 %v222
    %v224 = vmul.f32 %v223, -1e+30
    %v225 = vpack.c.bf16 %v213, %v213
    %v226 = vpack.c.bf16 %v219, %v219
    %v228 = vcombine.high %v224, %v224
    %231 = vrot.lane.b32.xlu0 %v225, 96
    %v232 = vpop.permute.xlu0 %231
    %vm233 = vcmask 64512
    %v235 = vsel %vm233, %v225, 0
    %v238 = vsel %vm233, %v232, 0
    %240 = vmatprep.subr.bf16.mxu0 0
    %241 = vmatpush1.bf16.xpose.msra.mxu0 %v238
    %242 = vmatprep.subr.bf16.mxu0 0
    %243 = vmatpush1.bf16.xpose.msra.mxu0 0
    %244 = vmatprep.subr.bf16.mxu0 0
    %245 = vmatpush1.bf16.xpose.msra.mxu0 0
    %246 = vmatprep.subr.bf16.mxu0 0
    %247 = vmatpush1.bf16.xpose.msra.mxu0 0
    %248 = vmatprep.subr.bf16.mxu0 0
    %249 = vmatpush1.bf16.xpose.msra.mxu0 0
    %250 = vmatprep.subr.bf16.mxu0 0
    %251 = vmatpush1.bf16.xpose.msra.mxu0 0
    %252 = vmatprep.subr.bf16.mxu0 0
    %253 = vmatpush1.bf16.xpose.msra.mxu0 0
    %254 = vmatprep.subr.bf16.mxu0 0
    %255 = vmatpush1.bf16.xpose.msra.mxu0 0
    %256 = vmatprep.subr.bf16.mxu0 0
    %257 = vmatpush1.bf16.xpose.msra.mxu0 0
    %258 = vmatprep.subr.bf16.mxu0 0
    %259 = vmatpush1.bf16.xpose.msra.mxu0 0
    %260 = vmatprep.subr.bf16.mxu0 0
    %261 = vmatpush1.bf16.xpose.msra.mxu0 0
    %262 = vmatprep.subr.bf16.mxu0 0
    %263 = vmatpush1.bf16.xpose.msra.mxu0 0
    %264 = vmatprep.subr.bf16.mxu0 0
    %265 = vmatpush1.bf16.xpose.msra.mxu0 0
    %266 = vmatprep.subr.bf16.mxu0 0
    %267 = vmatpush1.bf16.xpose.msra.mxu0 0
    %268 = vmatprep.subr.bf16.mxu0 0
    %269 = vmatpush1.bf16.xpose.msra.mxu0 0
    %270 = vmatprep.subr.bf16.mxu0 0
    %271 = vmatpush1.bf16.xpose.msra.mxu0 0
    %272 = vmatprep.mubr.bf16.mxu0 0
    %273 = vmatmul.mubr.bf16.gmra.mrb[0].mxu0 %v235
    %v274 = vpop.f32.mrb[0].mxu0
    %v275 = vadd.f32 %v224, %v274
    %v276 = vpop.f32.mrb[0].mxu0
    %v277 = vpop.f32.mrb[0].mxu0
    %v278 = vpop.f32.mrb[0].mxu0
    %279 = vdwg.mxu0
    %281 = vrot.lane.b32.xlu0 %v226, 96
    %v282 = vpop.permute.xlu0 %281
    %v284 = vsel %vm233, %v226, 0
    %v287 = vsel %vm233, %v282, 0
    %289 = vmatprep.subr.bf16.mxu0 0
    %290 = vmatpush1.bf16.xpose.msra.mxu0 %v287
    %291 = vmatprep.subr.bf16.mxu0 0
    %292 = vmatpush1.bf16.xpose.msra.mxu0 0
    %293 = vmatprep.subr.bf16.mxu0 0
    %294 = vmatpush1.bf16.xpose.msra.mxu0 0
    %295 = vmatprep.subr.bf16.mxu0 0
    %296 = vmatpush1.bf16.xpose.msra.mxu0 0
    %297 = vmatprep.subr.bf16.mxu0 0
    %298 = vmatpush1.bf16.xpose.msra.mxu0 0
    %299 = vmatprep.subr.bf16.mxu0 0
    %300 = vmatpush1.bf16.xpose.msra.mxu0 0
    %301 = vmatprep.subr.bf16.mxu0 0
    %302 = vmatpush1.bf16.xpose.msra.mxu0 0
    %303 = vmatprep.subr.bf16.mxu0 0
    %304 = vmatpush1.bf16.xpose.msra.mxu0 0
    %305 = vmatprep.subr.bf16.mxu0 0
    %306 = vmatpush1.bf16.xpose.msra.mxu0 0
    %307 = vmatprep.subr.bf16.mxu0 0
    %308 = vmatpush1.bf16.xpose.msra.mxu0 0
    %309 = vmatprep.subr.bf16.mxu0 0
    %310 = vmatpush1.bf16.xpose.msra.mxu0 0
    %311 = vmatprep.subr.bf16.mxu0 0
    %312 = vmatpush1.bf16.xpose.msra.mxu0 0
    %313 = vmatprep.subr.bf16.mxu0 0
    %314 = vmatpush1.bf16.xpose.msra.mxu0 0
    %315 = vmatprep.subr.bf16.mxu0 0
    %316 = vmatpush1.bf16.xpose.msra.mxu0 0
    %317 = vmatprep.subr.bf16.mxu0 0
    %318 = vmatpush1.bf16.xpose.msra.mxu0 0
    %319 = vmatprep.subr.bf16.mxu0 0
    %320 = vmatpush1.bf16.xpose.msra.mxu0 0
    %321 = vmatprep.mubr.bf16.mxu0 0
    %322 = vmatmul.mubr.bf16.gmra.mrb[0].mxu0 %v284
    %v323 = vpop.f32.mrb[0].mxu0
    %v324 = vadd.f32 %v228, %v323
    %v325 = vpop.f32.mrb[0].mxu0
    %v326 = vpop.f32.mrb[0].mxu0
    %v327 = vpop.f32.mrb[0].mxu0
    %328 = vdwg.mxu0
    %vm329 = vcmask 27648
    %v330 = vsel %vm329, %v275, -inf
    %331 = vmax.xlane.f32.xlu0 %v330
    %v332 = vpop.xlane.xlu0 %331
    %v333 = vsel %vm329, %v324, -inf
    %334 = vmax.xlane.f32.xlu0 %v333
    %v335 = vpop.xlane.xlu0 %334
    %v336 = vsub.f32 %v275, %v332
    %v337 = vsub.f32 %v324, %v335
    %v338 = vmul.f32 %v336, 1.442695
    %v339 = vpow.pop %v338
    %v340 = vmul.f32 %v337, 1.442695
    %v341 = vpow.pop %v340
    %v342 = vsel %vm329, %v339, 0.0
    %343 = vadd.xlane.f32.xlu0 %v342
    %v344 = vpop.xlane.xlu0 %343
    %v345 = vsel %vm329, %v341, 0.0
    %346 = vadd.xlane.f32.xlu0 %v345
    %v347 = vpop.xlane.xlu0 %346
    %v348 = vrcp.pop %v344
    %v349 = vrcp.pop %v347
    %v350 = vmul.f32 %v339, %v348
    %v351 = vmul.f32 %v341, %v349
    %v352 = vpack.c.bf16 %v350, %v350
    %v353 = vpack.c.bf16 %v351, %v351
    %354 = vrot.lane.b32.xlu0 %v225, 64
    %v355 = vpop.permute.xlu0 %354
    %vm356 = vcmask 31744
    %v358 = vsel %vm356, %v352, 0
    %vm360 = vcmask 1041408
    %v362 = vsel %vm360, %v355, 0
    %364 = vmatprep.subr.bf16.mxu0 0
    %365 = vmatpush1.bf16.msra.mxu0 %v362
    %366 = vmatprep.subr.bf16.mxu0 0
    %367 = vmatpush1.bf16.msra.mxu0 0
    %368 = vmatprep.subr.bf16.mxu0 0
    %369 = vmatpush1.bf16.msra.mxu0 0
    %370 = vmatprep.subr.bf16.mxu0 0
    %371 = vmatpush1.bf16.msra.mxu0 0
    %372 = vmatprep.subr.bf16.mxu0 0
    %373 = vmatpush1.bf16.msra.mxu0 0
    %374 = vmatprep.subr.bf16.mxu0 0
    %375 = vmatpush1.bf16.msra.mxu0 0
    %376 = vmatprep.subr.bf16.mxu0 0
    %377 = vmatpush1.bf16.msra.mxu0 0
    %378 = vmatprep.subr.bf16.mxu0 0
    %379 = vmatpush1.bf16.msra.mxu0 0
    %380 = vmatprep.subr.bf16.mxu0 0
    %381 = vmatpush1.bf16.msra.mxu0 0
    %382 = vmatprep.subr.bf16.mxu0 0
    %383 = vmatpush1.bf16.msra.mxu0 0
    %384 = vmatprep.subr.bf16.mxu0 0
    %385 = vmatpush1.bf16.msra.mxu0 0
    %386 = vmatprep.subr.bf16.mxu0 0
    %387 = vmatpush1.bf16.msra.mxu0 0
    %388 = vmatprep.subr.bf16.mxu0 0
    %389 = vmatpush1.bf16.msra.mxu0 0
    %390 = vmatprep.subr.bf16.mxu0 0
    %391 = vmatpush1.bf16.msra.mxu0 0
    %392 = vmatprep.subr.bf16.mxu0 0
    %393 = vmatpush1.bf16.msra.mxu0 0
    %394 = vmatprep.subr.bf16.mxu0 0
    %395 = vmatpush1.bf16.msra.mxu0 0
    %396 = vmatprep.mubr.bf16.mxu0 0
    %397 = vmatmul.mubr.bf16.gmra.mrb[0].mxu0 %v358
    %v398 = vpop.f32.mrb[0].mxu0
    %v399 = vadd.f32 0.0, %v398
    %v400 = vpop.f32.mrb[0].mxu0
    %v401 = vpop.f32.mrb[0].mxu0
    %v402 = vpop.f32.mrb[0].mxu0
    %403 = vdwg.mxu0
    %404 = vrot.lane.b32.xlu0 %v226, 64
    %v405 = vpop.permute.xlu0 %404
    %v407 = vsel %vm356, %v353, 0
    %v410 = vsel %vm360, %v405, 0
    %412 = vmatprep.subr.bf16.mxu0 0
    %413 = vmatpush1.bf16.msra.mxu0 %v410
    %414 = vmatprep.subr.bf16.mxu0 0
    %415 = vmatpush1.bf16.msra.mxu0 0
    %416 = vmatprep.subr.bf16.mxu0 0
    %417 = vmatpush1.bf16.msra.mxu0 0
    %418 = vmatprep.subr.bf16.mxu0 0
    %419 = vmatpush1.bf16.msra.mxu0 0
    %420 = vmatprep.subr.bf16.mxu0 0
    %421 = vmatpush1.bf16.msra.mxu0 0
    %422 = vmatprep.subr.bf16.mxu0 0
    %423 = vmatpush1.bf16.msra.mxu0 0
    %424 = vmatprep.subr.bf16.mxu0 0
    %425 = vmatpush1.bf16.msra.mxu0 0
    %426 = vmatprep.subr.bf16.mxu0 0
    %427 = vmatpush1.bf16.msra.mxu0 0
    %428 = vmatprep.subr.bf16.mxu0 0
    %429 = vmatpush1.bf16.msra.mxu0 0
    %430 = vmatprep.subr.bf16.mxu0 0
    %431 = vmatpush1.bf16.msra.mxu0 0
    %432 = vmatprep.subr.bf16.mxu0 0
    %433 = vmatpush1.bf16.msra.mxu0 0
    %434 = vmatprep.subr.bf16.mxu0 0
    %435 = vmatpush1.bf16.msra.mxu0 0
    %436 = vmatprep.subr.bf16.mxu0 0
    %437 = vmatpush1.bf16.msra.mxu0 0
    %438 = vmatprep.subr.bf16.mxu0 0
    %439 = vmatpush1.bf16.msra.mxu0 0
    %440 = vmatprep.subr.bf16.mxu0 0
    %441 = vmatpush1.bf16.msra.mxu0 0
    %442 = vmatprep.subr.bf16.mxu0 0
    %443 = vmatpush1.bf16.msra.mxu0 0
    %444 = vmatprep.mubr.bf16.mxu0 0
    %445 = vmatmul.mubr.bf16.gmra.mrb[0].mxu0 %v407
    %v446 = vpop.f32.mrb[0].mxu0
    %v447 = vadd.f32 0.0, %v446
    %v448 = vpop.f32.mrb[0].mxu0
    %v449 = vpop.f32.mrb[0].mxu0
    %v450 = vpop.f32.mrb[0].mxu0
    %451 = vdwg.mxu0
    %452 = vrot.lane.b32.xlu0 %v225, 120
    %v453 = vpop.permute.xlu0 %452
    %454 = vrot.lane.b32.xlu0 %v225, 88
    %v455 = vpop.permute.xlu0 %454
    %456 = vrot.lane.b32.xlu0 %v224, 124
    %v457 = vpop.permute.xlu0 %456
    %v460 = vsel %vm233, %v453, 0
    %v463 = vsel %vm233, %v455, 0
    %465 = vmatprep.subr.bf16.mxu0 0
    %466 = vmatpush1.bf16.xpose.msra.mxu0 %v463
    %467 = vmatprep.subr.bf16.mxu0 0
    %468 = vmatpush1.bf16.xpose.msra.mxu0 0
    %469 = vmatprep.subr.bf16.mxu0 0
    %470 = vmatpush1.bf16.xpose.msra.mxu0 0
    %471 = vmatprep.subr.bf16.mxu0 0
    %472 = vmatpush1.bf16.xpose.msra.mxu0 0
    %473 = vmatprep.subr.bf16.mxu0 0
    %474 = vmatpush1.bf16.xpose.msra.mxu0 0
    %475 = vmatprep.subr.bf16.mxu0 0
    %476 = vmatpush1.bf16.xpose.msra.mxu0 0
    %477 = vmatprep.subr.bf16.mxu0 0
    %478 = vmatpush1.bf16.xpose.msra.mxu0 0
    %479 = vmatprep.subr.bf16.mxu0 0
    %480 = vmatpush1.bf16.xpose.msra.mxu0 0
    %481 = vmatprep.subr.bf16.mxu0 0
    %482 = vmatpush1.bf16.xpose.msra.mxu0 0
    %483 = vmatprep.subr.bf16.mxu0 0
    %484 = vmatpush1.bf16.xpose.msra.mxu0 0
    %485 = vmatprep.subr.bf16.mxu0 0
    %486 = vmatpush1.bf16.xpose.msra.mxu0 0
    %487 = vmatprep.subr.bf16.mxu0 0
    %488 = vmatpush1.bf16.xpose.msra.mxu0 0
    %489 = vmatprep.subr.bf16.mxu0 0
    %490 = vmatpush1.bf16.xpose.msra.mxu0 0
    %491 = vmatprep.subr.bf16.mxu0 0
    %492 = vmatpush1.bf16.xpose.msra.mxu0 0
    %493 = vmatprep.subr.bf16.mxu0 0
    %494 = vmatpush1.bf16.xpose.msra.mxu0 0
    %495 = vmatprep.subr.bf16.mxu0 0
    %496 = vmatpush1.bf16.xpose.msra.mxu0 0
    %497 = vmatprep.mubr.bf16.mxu0 0
    %498 = vmatmul.mubr.bf16.gmra.mrb[0].mxu0 %v460
    %v499 = vpop.f32.mrb[0].mxu0
    %v500 = vadd.f32 %v457, %v499
    %v501 = vpop.f32.mrb[0].mxu0
    %v502 = vpop.f32.mrb[0].mxu0
    %v503 = vpop.f32.mrb[0].mxu0
    %504 = vdwg.mxu0
    %505 = vrot.lane.b32.xlu0 %v226, 120
    %v506 = vpop.permute.xlu0 %505
    %507 = vrot.lane.b32.xlu0 %v226, 88
    %v508 = vpop.permute.xlu0 %507
    %509 = vrot.lane.b32.xlu0 %v228, 124
    %v510 = vpop.permute.xlu0 %509
    %v513 = vsel %vm233, %v506, 0
    %v516 = vsel %vm233, %v508, 0
    %518 = vmatprep.subr.bf16.mxu0 0
    %519 = vmatpush1.bf16.xpose.msra.mxu0 %v516
    %520 = vmatprep.subr.bf16.mxu0 0
    %521 = vmatpush1.bf16.xpose.msra.mxu0 0
    %522 = vmatprep.subr.bf16.mxu0 0
    %523 = vmatpush1.bf16.xpose.msra.mxu0 0
    %524 = vmatprep.subr.bf16.mxu0 0
    %525 = vmatpush1.bf16.xpose.msra.mxu0 0
    %526 = vmatprep.subr.bf16.mxu0 0
    %527 = vmatpush1.bf16.xpose.msra.mxu0 0
    %528 = vmatprep.subr.bf16.mxu0 0
    %529 = vmatpush1.bf16.xpose.msra.mxu0 0
    %530 = vmatprep.subr.bf16.mxu0 0
    %531 = vmatpush1.bf16.xpose.msra.mxu0 0
    %532 = vmatprep.subr.bf16.mxu0 0
    %533 = vmatpush1.bf16.xpose.msra.mxu0 0
    %534 = vmatprep.subr.bf16.mxu0 0
    %535 = vmatpush1.bf16.xpose.msra.mxu0 0
    %536 = vmatprep.subr.bf16.mxu0 0
    %537 = vmatpush1.bf16.xpose.msra.mxu0 0
    %538 = vmatprep.subr.bf16.mxu0 0
    %539 = vmatpush1.bf16.xpose.msra.mxu0 0
    %540 = vmatprep.subr.bf16.mxu0 0
    %541 = vmatpush1.bf16.xpose.msra.mxu0 0
    %542 = vmatprep.subr.bf16.mxu0 0
    %543 = vmatpush1.bf16.xpose.msra.mxu0 0
    %544 = vmatprep.subr.bf16.mxu0 0
    %545 = vmatpush1.bf16.xpose.msra.mxu0 0
    %546 = vmatprep.subr.bf16.mxu0 0
    %547 = vmatpush1.bf16.xpose.msra.mxu0 0
    %548 = vmatprep.subr.bf16.mxu0 0
    %549 = vmatpush1.bf16.xpose.msra.mxu0 0
    %550 = vmatprep.mubr.bf16.mxu0 0
    %551 = vmatmul.mubr.bf16.gmra.mrb[0].mxu0 %v513
    %v552 = vpop.f32.mrb[0].mxu0
    %v553 = vadd.f32 %v510, %v552
    %v554 = vpop.f32.mrb[0].mxu0
    %v555 = vpop.f32.mrb[0].mxu0
    %v556 = vpop.f32.mrb[0].mxu0
    %557 = vdwg.mxu0
    %v558 = vsel %vm329, %v500, -inf
    %559 = vmax.xlane.f32.xlu0 %v558
    %v560 = vpop.xlane.xlu0 %559
    %v561 = vsel %vm329, %v553, -inf
    %562 = vmax.xlane.f32.xlu0 %v561
    %v563 = vpop.xlane.xlu0 %562
    %v564 = vsub.f32 %v500, %v560
    %v565 = vsub.f32 %v553, %v563
    %v566 = vmul.f32 %v564, 1.442695
    %v567 = vpow.pop %v566
    %v568 = vmul.f32 %v565, 1.442695
    %v569 = vpow.pop %v568
    %v570 = vsel %vm329, %v567, 0.0
    %571 = vadd.xlane.f32.xlu0 %v570
    %v572 = vpop.xlane.xlu0 %571
    %v573 = vsel %vm329, %v569, 0.0
    %574 = vadd.xlane.f32.xlu0 %v573
    %v575 = vpop.xlane.xlu0 %574
    %v576 = vrcp.pop %v572
    %v577 = vrcp.pop %v575
    %v578 = vmul.f32 %v567, %v576
    %v579 = vmul.f32 %v569, %v577
    %v580 = vpack.c.bf16 %v578, %v578
    %v581 = vpack.c.bf16 %v579, %v579
    %582 = vrot.lane.b32.xlu0 %v225, 56
    %v583 = vpop.permute.xlu0 %582
    %v585 = vsel %vm356, %v580, 0
    %v588 = vsel %vm360, %v583, 0
    %590 = vmatprep.subr.bf16.mxu0 0
    %591 = vmatpush1.bf16.msra.mxu0 %v588
    %592 = vmatprep.subr.bf16.mxu0 0
    %593 = vmatpush1.bf16.msra.mxu0 0
    %594 = vmatprep.subr.bf16.mxu0 0
    %595 = vmatpush1.bf16.msra.mxu0 0
    %596 = vmatprep.subr.bf16.mxu0 0
    %597 = vmatpush1.bf16.msra.mxu0 0
    %598 = vmatprep.subr.bf16.mxu0 0
    %599 = vmatpush1.bf16.msra.mxu0 0
    %600 = vmatprep.subr.bf16.mxu0 0
    %601 = vmatpush1.bf16.msra.mxu0 0
    %602 = vmatprep.subr.bf16.mxu0 0
    %603 = vmatpush1.bf16.msra.mxu0 0
    %604 = vmatprep.subr.bf16.mxu0 0
    %605 = vmatpush1.bf16.msra.mxu0 0
    %606 = vmatprep.subr.bf16.mxu0 0
    %607 = vmatpush1.bf16.msra.mxu0 0
    %608 = vmatprep.subr.bf16.mxu0 0
    %609 = vmatpush1.bf16.msra.mxu0 0
    %610 = vmatprep.subr.bf16.mxu0 0
    %611 = vmatpush1.bf16.msra.mxu0 0
    %612 = vmatprep.subr.bf16.mxu0 0
    %613 = vmatpush1.bf16.msra.mxu0 0
    %614 = vmatprep.subr.bf16.mxu0 0
    %615 = vmatpush1.bf16.msra.mxu0 0
    %616 = vmatprep.subr.bf16.mxu0 0
    %617 = vmatpush1.bf16.msra.mxu0 0
    %618 = vmatprep.subr.bf16.mxu0 0
    %619 = vmatpush1.bf16.msra.mxu0 0
    %620 = vmatprep.subr.bf16.mxu0 0
    %621 = vmatpush1.bf16.msra.mxu0 0
    %622 = vmatprep.mubr.bf16.mxu0 0
    %623 = vmatmul.mubr.bf16.gmra.mrb[0].mxu0 %v585
    %v624 = vpop.f32.mrb[0].mxu0
    %v625 = vadd.f32 0.0, %v624
    %v626 = vpop.f32.mrb[0].mxu0
    %v627 = vpop.f32.mrb[0].mxu0
    %v628 = vpop.f32.mrb[0].mxu0
    %629 = vdwg.mxu0
    %630 = vrot.lane.b32.xlu0 %v226, 56
    %v631 = vpop.permute.xlu0 %630
    %v633 = vsel %vm356, %v581, 0
    %v636 = vsel %vm360, %v631, 0
    %638 = vmatprep.subr.bf16.mxu0 0
    %639 = vmatpush1.bf16.msra.mxu0 %v636
    %640 = vmatprep.subr.bf16.mxu0 0
    %641 = vmatpush1.bf16.msra.mxu0 0
    %642 = vmatprep.subr.bf16.mxu0 0
    %643 = vmatpush1.bf16.msra.mxu0 0
    %644 = vmatprep.subr.bf16.mxu0 0
    %645 = vmatpush1.bf16.msra.mxu0 0
    %646 = vmatprep.subr.bf16.mxu0 0
    %647 = vmatpush1.bf16.msra.mxu0 0
    %648 = vmatprep.subr.bf16.mxu0 0
    %649 = vmatpush1.bf16.msra.mxu0 0
    %650 = vmatprep.subr.bf16.mxu0 0
    %651 = vmatpush1.bf16.msra.mxu0 0
    %652 = vmatprep.subr.bf16.mxu0 0
    %653 = vmatpush1.bf16.msra.mxu0 0
    %654 = vmatprep.subr.bf16.mxu0 0
    %655 = vmatpush1.bf16.msra.mxu0 0
    %656 = vmatprep.subr.bf16.mxu0 0
    %657 = vmatpush1.bf16.msra.mxu0 0
    %658 = vmatprep.subr.bf16.mxu0 0
    %659 = vmatpush1.bf16.msra.mxu0 0
    %660 = vmatprep.subr.bf16.mxu0 0
    %661 = vmatpush1.bf16.msra.mxu0 0
    %662 = vmatprep.subr.bf16.mxu0 0
    %663 = vmatpush1.bf16.msra.mxu0 0
    %664 = vmatprep.subr.bf16.mxu0 0
    %665 = vmatpush1.bf16.msra.mxu0 0
    %666 = vmatprep.subr.bf16.mxu0 0
    %667 = vmatpush1.bf16.msra.mxu0 0
    %668 = vmatprep.subr.bf16.mxu0 0
    %669 = vmatpush1.bf16.msra.mxu0 0
    %670 = vmatprep.mubr.bf16.mxu0 0
    %671 = vmatmul.mubr.bf16.gmra.mrb[0].mxu0 %v633
    %v672 = vpop.f32.mrb[0].mxu0
    %v673 = vadd.f32 0.0, %v672
    %v674 = vpop.f32.mrb[0].mxu0
    %v675 = vpop.f32.mrb[0].mxu0
    %v676 = vpop.f32.mrb[0].mxu0
    %677 = vdwg.mxu0
    %678 = vrot.lane.b32.xlu0 %v225, 112
    %v679 = vpop.permute.xlu0 %678
    %680 = vrot.lane.b32.xlu0 %v225, 80
    %v681 = vpop.permute.xlu0 %680
    %682 = vrot.lane.b32.xlu0 %v224, 120
    %v683 = vpop.permute.xlu0 %682
    %v686 = vsel %vm233, %v679, 0
    %v689 = vsel %vm233, %v681, 0
    %691 = vmatprep.subr.bf16.mxu0 0
    %692 = vmatpush1.bf16.xpose.msra.mxu0 %v689
    %693 = vmatprep.subr.bf16.mxu0 0
    %694 = vmatpush1.bf16.xpose.msra.mxu0 0
    %695 = vmatprep.subr.bf16.mxu0 0
    %696 = vmatpush1.bf16.xpose.msra.mxu0 0
    %697 = vmatprep.subr.bf16.mxu0 0
    %698 = vmatpush1.bf16.xpose.msra.mxu0 0
    %699 = vmatprep.subr.bf16.mxu0 0
    %700 = vmatpush1.bf16.xpose.msra.mxu0 0
    %701 = vmatprep.subr.bf16.mxu0 0
    %702 = vmatpush1.bf16.xpose.msra.mxu0 0
    %703 = vmatprep.subr.bf16.mxu0 0
    %704 = vmatpush1.bf16.xpose.msra.mxu0 0
    %705 = vmatprep.subr.bf16.mxu0 0
    %706 = vmatpush1.bf16.xpose.msra.mxu0 0
    %707 = vmatprep.subr.bf16.mxu0 0
    %708 = vmatpush1.bf16.xpose.msra.mxu0 0
    %709 = vmatprep.subr.bf16.mxu0 0
    %710 = vmatpush1.bf16.xpose.msra.mxu0 0
    %711 = vmatprep.subr.bf16.mxu0 0
    %712 = vmatpush1.bf16.xpose.msra.mxu0 0
    %713 = vmatprep.subr.bf16.mxu0 0
    %714 = vmatpush1.bf16.xpose.msra.mxu0 0
    %715 = vmatprep.subr.bf16.mxu0 0
    %716 = vmatpush1.bf16.xpose.msra.mxu0 0
    %717 = vmatprep.subr.bf16.mxu0 0
    %718 = vmatpush1.bf16.xpose.msra.mxu0 0
    %719 = vmatprep.subr.bf16.mxu0 0
    %720 = vmatpush1.bf16.xpose.msra.mxu0 0
    %721 = vmatprep.subr.bf16.mxu0 0
    %722 = vmatpush1.bf16.xpose.msra.mxu0 0
    %723 = vmatprep.mubr.bf16.mxu0 0
    %724 = vmatmul.mubr.bf16.gmra.mrb[0].mxu0 %v686
    %v725 = vpop.f32.mrb[0].mxu0
    %v726 = vadd.f32 %v683, %v725
    %v727 = vpop.f32.mrb[0].mxu0
    %v728 = vpop.f32.mrb[0].mxu0
    %v729 = vpop.f32.mrb[0].mxu0
    %730 = vdwg.mxu0
    %731 = vrot.lane.b32.xlu0 %v226, 112
    %v732 = vpop.permute.xlu0 %731
    %733 = vrot.lane.b32.xlu0 %v226, 80
    %v734 = vpop.permute.xlu0 %733
    %735 = vrot.lane.b32.xlu0 %v228, 120
    %v736 = vpop.permute.xlu0 %735
    %v739 = vsel %vm233, %v732, 0
    %v742 = vsel %vm233, %v734, 0
    %744 = vmatprep.subr.bf16.mxu0 0
    %745 = vmatpush1.bf16.xpose.msra.mxu0 %v742
    %746 = vmatprep.subr.bf16.mxu0 0
    %747 = vmatpush1.bf16.xpose.msra.mxu0 0
    %748 = vmatprep.subr.bf16.mxu0 0
    %749 = vmatpush1.bf16.xpose.msra.mxu0 0
    %750 = vmatprep.subr.bf16.mxu0 0
    %751 = vmatpush1.bf16.xpose.msra.mxu0 0
    %752 = vmatprep.subr.bf16.mxu0 0
    %753 = vmatpush1.bf16.xpose.msra.mxu0 0
    %754 = vmatprep.subr.bf16.mxu0 0
    %755 = vmatpush1.bf16.xpose.msra.mxu0 0
    %756 = vmatprep.subr.bf16.mxu0 0
    %757 = vmatpush1.bf16.xpose.msra.mxu0 0
    %758 = vmatprep.subr.bf16.mxu0 0
    %759 = vmatpush1.bf16.xpose.msra.mxu0 0
    %760 = vmatprep.subr.bf16.mxu0 0
    %761 = vmatpush1.bf16.xpose.msra.mxu0 0
    %762 = vmatprep.subr.bf16.mxu0 0
    %763 = vmatpush1.bf16.xpose.msra.mxu0 0
    %764 = vmatprep.subr.bf16.mxu0 0
    %765 = vmatpush1.bf16.xpose.msra.mxu0 0
    %766 = vmatprep.subr.bf16.mxu0 0
    %767 = vmatpush1.bf16.xpose.msra.mxu0 0
    %768 = vmatprep.subr.bf16.mxu0 0
    %769 = vmatpush1.bf16.xpose.msra.mxu0 0
    %770 = vmatprep.subr.bf16.mxu0 0
    %771 = vmatpush1.bf16.xpose.msra.mxu0 0
    %772 = vmatprep.subr.bf16.mxu0 0
    %773 = vmatpush1.bf16.xpose.msra.mxu0 0
    %774 = vmatprep.subr.bf16.mxu0 0
    %775 = vmatpush1.bf16.xpose.msra.mxu0 0
    %776 = vmatprep.mubr.bf16.mxu0 0
    %777 = vmatmul.mubr.bf16.gmra.mrb[0].mxu0 %v739
    %v778 = vpop.f32.mrb[0].mxu0
    %v779 = vadd.f32 %v736, %v778
    %v780 = vpop.f32.mrb[0].mxu0
    %v781 = vpop.f32.mrb[0].mxu0
    %v782 = vpop.f32.mrb[0].mxu0
    %783 = vdwg.mxu0
    %v784 = vsel %vm329, %v726, -inf
    %785 = vmax.xlane.f32.xlu0 %v784
    %v786 = vpop.xlane.xlu0 %785
    %v787 = vsel %vm329, %v779, -inf
    %788 = vmax.xlane.f32.xlu0 %v787
    %v789 = vpop.xlane.xlu0 %788
    %v790 = vsub.f32 %v726, %v786
    %v791 = vsub.f32 %v779, %v789
    %v792 = vmul.f32 %v790, 1.442695
    %v793 = vpow.pop %v792
    %v794 = vmul.f32 %v791, 1.442695
    %v795 = vpow.pop %v794
    %v796 = vsel %vm329, %v793, 0.0
    %797 = vadd.xlane.f32.xlu0 %v796
    %v798 = vpop.xlane.xlu0 %797
    %v799 = vsel %vm329, %v795, 0.0
    %800 = vadd.xlane.f32.xlu0 %v799
    %v801 = vpop.xlane.xlu0 %800
    %v802 = vrcp.pop %v798
    %v803 = vrcp.pop %v801
    %v804 = vmul.f32 %v793, %v802
    %v805 = vmul.f32 %v795, %v803
    %v806 = vpack.c.bf16 %v804, %v804
    %v807 = vpack.c.bf16 %v805, %v805
    %808 = vrot.lane.b32.xlu0 %v225, 48
    %v809 = vpop.permute.xlu0 %808
    %v811 = vsel %vm356, %v806, 0
    %v814 = vsel %vm360, %v809, 0
    %816 = vmatprep.subr.bf16.mxu0 0
    %817 = vmatpush1.bf16.msra.mxu0 %v814
    %818 = vmatprep.subr.bf16.mxu0 0
    %819 = vmatpush1.bf16.msra.mxu0 0
    %820 = vmatprep.subr.bf16.mxu0 0
    %821 = vmatpush1.bf16.msra.mxu0 0
    %822 = vmatprep.subr.bf16.mxu0 0
    %823 = vmatpush1.bf16.msra.mxu0 0
    %824 = vmatprep.subr.bf16.mxu0 0
    %825 = vmatpush1.bf16.msra.mxu0 0
    %826 = vmatprep.subr.bf16.mxu0 0
    %827 = vmatpush1.bf16.msra.mxu0 0
    %828 = vmatprep.subr.bf16.mxu0 0
    %829 = vmatpush1.bf16.msra.mxu0 0
    %830 = vmatprep.subr.bf16.mxu0 0
    %831 = vmatpush1.bf16.msra.mxu0 0
    %832 = vmatprep.subr.bf16.mxu0 0
    %833 = vmatpush1.bf16.msra.mxu0 0
    %834 = vmatprep.subr.bf16.mxu0 0
    %835 = vmatpush1.bf16.msra.mxu0 0
    %836 = vmatprep.subr.bf16.mxu0 0
    %837 = vmatpush1.bf16.msra.mxu0 0
    %838 = vmatprep.subr.bf16.mxu0 0
    %839 = vmatpush1.bf16.msra.mxu0 0
    %840 = vmatprep.subr.bf16.mxu0 0
    %841 = vmatpush1.bf16.msra.mxu0 0
    %842 = vmatprep.subr.bf16.mxu0 0
    %843 = vmatpush1.bf16.msra.mxu0 0
    %844 = vmatprep.subr.bf16.mxu0 0
    %845 = vmatpush1.bf16.msra.mxu0 0
    %846 = vmatprep.subr.bf16.mxu0 0
    %847 = vmatpush1.bf16.msra.mxu0 0
    %848 = vmatprep.mubr.bf16.mxu0 0
    %849 = vmatmul.mubr.bf16.gmra.mrb[0].mxu0 %v811
    %v850 = vpop.f32.mrb[0].mxu0
    %v851 = vadd.f32 0.0, %v850
    %v852 = vpop.f32.mrb[0].mxu0
    %v853 = vpop.f32.mrb[0].mxu0
    %v854 = vpop.f32.mrb[0].mxu0
    %855 = vdwg.mxu0
    %856 = vrot.lane.b32.xlu0 %v226, 48
    %v857 = vpop.permute.xlu0 %856
    %v859 = vsel %vm356, %v807, 0
    %v862 = vsel %vm360, %v857, 0
    %864 = vmatprep.subr.bf16.mxu0 0
    %865 = vmatpush1.bf16.msra.mxu0 %v862
    %866 = vmatprep.subr.bf16.mxu0 0
    %867 = vmatpush1.bf16.msra.mxu0 0
    %868 = vmatprep.subr.bf16.mxu0 0
    %869 = vmatpush1.bf16.msra.mxu0 0
    %870 = vmatprep.subr.bf16.mxu0 0
    %871 = vmatpush1.bf16.msra.mxu0 0
    %872 = vmatprep.subr.bf16.mxu0 0
    %873 = vmatpush1.bf16.msra.mxu0 0
    %874 = vmatprep.subr.bf16.mxu0 0
    %875 = vmatpush1.bf16.msra.mxu0 0
    %876 = vmatprep.subr.bf16.mxu0 0
    %877 = vmatpush1.bf16.msra.mxu0 0
    %878 = vmatprep.subr.bf16.mxu0 0
    %879 = vmatpush1.bf16.msra.mxu0 0
    %880 = vmatprep.subr.bf16.mxu0 0
    %881 = vmatpush1.bf16.msra.mxu0 0
    %882 = vmatprep.subr.bf16.mxu0 0
    %883 = vmatpush1.bf16.msra.mxu0 0
    %884 = vmatprep.subr.bf16.mxu0 0
    %885 = vmatpush1.bf16.msra.mxu0 0
    %886 = vmatprep.subr.bf16.mxu0 0
    %887 = vmatpush1.bf16.msra.mxu0 0
    %888 = vmatprep.subr.bf16.mxu0 0
    %889 = vmatpush1.bf16.msra.mxu0 0
    %890 = vmatprep.subr.bf16.mxu0 0
    %891 = vmatpush1.bf16.msra.mxu0 0
    %892 = vmatprep.subr.bf16.mxu0 0
    %893 = vmatpush1.bf16.msra.mxu0 0
    %894 = vmatprep.subr.bf16.mxu0 0
    %895 = vmatpush1.bf16.msra.mxu0 0
    %896 = vmatprep.mubr.bf16.mxu0 0
    %897 = vmatmul.mubr.bf16.gmra.mrb[0].mxu0 %v859
    %v898 = vpop.f32.mrb[0].mxu0
    %v899 = vadd.f32 0.0, %v898
    %v900 = vpop.f32.mrb[0].mxu0
    %v901 = vpop.f32.mrb[0].mxu0
    %v902 = vpop.f32.mrb[0].mxu0
    %903 = vdwg.mxu0
    %904 = vrot.lane.b32.xlu0 %v225, 104
    %v905 = vpop.permute.xlu0 %904
    %906 = vrot.lane.b32.xlu0 %v225, 72
    %v907 = vpop.permute.xlu0 %906
    %908 = vrot.lane.b32.xlu0 %v224, 116
    %v909 = vpop.permute.xlu0 %908
    %v912 = vsel %vm233, %v905, 0
    %v915 = vsel %vm233, %v907, 0
    %917 = vmatprep.subr.bf16.mxu0 0
    %918 = vmatpush1.bf16.xpose.msra.mxu0 %v915
    %919 = vmatprep.subr.bf16.mxu0 0
    %920 = vmatpush1.bf16.xpose.msra.mxu0 0
    %921 = vmatprep.subr.bf16.mxu0 0
    %922 = vmatpush1.bf16.xpose.msra.mxu0 0
    %923 = vmatprep.subr.bf16.mxu0 0
    %924 = vmatpush1.bf16.xpose.msra.mxu0 0
    %925 = vmatprep.subr.bf16.mxu0 0
    %926 = vmatpush1.bf16.xpose.msra.mxu0 0
    %927 = vmatprep.subr.bf16.mxu0 0
    %928 = vmatpush1.bf16.xpose.msra.mxu0 0
    %929 = vmatprep.subr.bf16.mxu0 0
    %930 = vmatpush1.bf16.xpose.msra.mxu0 0
    %931 = vmatprep.subr.bf16.mxu0 0
    %932 = vmatpush1.bf16.xpose.msra.mxu0 0
    %933 = vmatprep.subr.bf16.mxu0 0
    %934 = vmatpush1.bf16.xpose.msra.mxu0 0
    %935 = vmatprep.subr.bf16.mxu0 0
    %936 = vmatpush1.bf16.xpose.msra.mxu0 0
    %937 = vmatprep.subr.bf16.mxu0 0
    %938 = vmatpush1.bf16.xpose.msra.mxu0 0
    %939 = vmatprep.subr.bf16.mxu0 0
    %940 = vmatpush1.bf16.xpose.msra.mxu0 0
    %941 = vmatprep.subr.bf16.mxu0 0
    %942 = vmatpush1.bf16.xpose.msra.mxu0 0
    %943 = vmatprep.subr.bf16.mxu0 0
    %944 = vmatpush1.bf16.xpose.msra.mxu0 0
    %945 = vmatprep.subr.bf16.mxu0 0
    %946 = vmatpush1.bf16.xpose.msra.mxu0 0
    %947 = vmatprep.subr.bf16.mxu0 0
    %948 = vmatpush1.bf16.xpose.msra.mxu0 0
    %949 = vmatprep.mubr.bf16.mxu0 0
    %950 = vmatmul.mubr.bf16.gmra.mrb[0].mxu0 %v912
    %v951 = vpop.f32.mrb[0].mxu0
    %v952 = vadd.f32 %v909, %v951
    %v953 = vpop.f32.mrb[0].mxu0
    %v954 = vpop.f32.mrb[0].mxu0
    %v955 = vpop.f32.mrb[0].mxu0
    %956 = vdwg.mxu0
    %957 = vrot.lane.b32.xlu0 %v226, 104
    %v958 = vpop.permute.xlu0 %957
    %959 = vrot.lane.b32.xlu0 %v226, 72
    %v960 = vpop.permute.xlu0 %959
    %961 = vrot.lane.b32.xlu0 %v228, 116
    %v962 = vpop.permute.xlu0 %961
    %v965 = vsel %vm233, %v958, 0
    %v968 = vsel %vm233, %v960, 0
    %970 = vmatprep.subr.bf16.mxu0 0
    %971 = vmatpush1.bf16.xpose.msra.mxu0 %v968
    %972 = vmatprep.subr.bf16.mxu0 0
    %973 = vmatpush1.bf16.xpose.msra.mxu0 0
    %974 = vmatprep.subr.bf16.mxu0 0
    %975 = vmatpush1.bf16.xpose.msra.mxu0 0
    %976 = vmatprep.subr.bf16.mxu0 0
    %977 = vmatpush1.bf16.xpose.msra.mxu0 0
    %978 = vmatprep.subr.bf16.mxu0 0
    %979 = vmatpush1.bf16.xpose.msra.mxu0 0
    %980 = vmatprep.subr.bf16.mxu0 0
    %981 = vmatpush1.bf16.xpose.msra.mxu0 0
    %982 = vmatprep.subr.bf16.mxu0 0
    %983 = vmatpush1.bf16.xpose.msra.mxu0 0
    %984 = vmatprep.subr.bf16.mxu0 0
    %985 = vmatpush1.bf16.xpose.msra.mxu0 0
    %986 = vmatprep.subr.bf16.mxu0 0
    %987 = vmatpush1.bf16.xpose.msra.mxu0 0
    %988 = vmatprep.subr.bf16.mxu0 0
    %989 = vmatpush1.bf16.xpose.msra.mxu0 0
    %990 = vmatprep.subr.bf16.mxu0 0
    %991 = vmatpush1.bf16.xpose.msra.mxu0 0
    %992 = vmatprep.subr.bf16.mxu0 0
    %993 = vmatpush1.bf16.xpose.msra.mxu0 0
    %994 = vmatprep.subr.bf16.mxu0 0
    %995 = vmatpush1.bf16.xpose.msra.mxu0 0
    %996 = vmatprep.subr.bf16.mxu0 0
    %997 = vmatpush1.bf16.xpose.msra.mxu0 0
    %998 = vmatprep.subr.bf16.mxu0 0
    %999 = vmatpush1.bf16.xpose.msra.mxu0 0
    %1000 = vmatprep.subr.bf16.mxu0 0
    %1001 = vmatpush1.bf16.xpose.msra.mxu0 0
    %1002 = vmatprep.mubr.bf16.mxu0 0
    %1003 = vmatmul.mubr.bf16.gmra.mrb[0].mxu0 %v965
    %v1004 = vpop.f32.mrb[0].mxu0
    %v1005 = vadd.f32 %v962, %v1004
    %v1006 = vpop.f32.mrb[0].mxu0
    %v1007 = vpop.f32.mrb[0].mxu0
    %v1008 = vpop.f32.mrb[0].mxu0
    %1009 = vdwg.mxu0
    %v1010 = vsel %vm329, %v952, -inf
    %1011 = vmax.xlane.f32.xlu0 %v1010
    %v1012 = vpop.xlane.xlu0 %1011
    %v1013 = vsel %vm329, %v1005, -inf
    %1014 = vmax.xlane.f32.xlu0 %v1013
    %v1015 = vpop.xlane.xlu0 %1014
    %v1016 = vsub.f32 %v952, %v1012
    %v1017 = vsub.f32 %v1005, %v1015
    %v1018 = vmul.f32 %v1016, 1.442695
    %v1019 = vpow.pop %v1018
    %v1020 = vmul.f32 %v1017, 1.442695
    %v1021 = vpow.pop %v1020
    %v1022 = vsel %vm329, %v1019, 0.0
    %1023 = vadd.xlane.f32.xlu0 %v1022
    %v1024 = vpop.xlane.xlu0 %1023
    %v1025 = vsel %vm329, %v1021, 0.0
    %1026 = vadd.xlane.f32.xlu0 %v1025
    %v1027 = vpop.xlane.xlu0 %1026
    %v1028 = vrcp.pop %v1024
    %v1029 = vrcp.pop %v1027
    %v1030 = vmul.f32 %v1019, %v1028
    %v1031 = vmul.f32 %v1021, %v1029
    %v1032 = vpack.c.bf16 %v1030, %v1030
    %v1033 = vpack.c.bf16 %v1031, %v1031
    %1034 = vrot.lane.b32.xlu0 %v225, 40
    %v1035 = vpop.permute.xlu0 %1034
    %v1037 = vsel %vm356, %v1032, 0
    %v1040 = vsel %vm360, %v1035, 0
    %1042 = vmatprep.subr.bf16.mxu0 0
    %1043 = vmatpush1.bf16.msra.mxu0 %v1040
    %1044 = vmatprep.subr.bf16.mxu0 0
    %1045 = vmatpush1.bf16.msra.mxu0 0
    %1046 = vmatprep.subr.bf16.mxu0 0
    %1047 = vmatpush1.bf16.msra.mxu0 0
    %1048 = vmatprep.subr.bf16.mxu0 0
    %1049 = vmatpush1.bf16.msra.mxu0 0
    %1050 = vmatprep.subr.bf16.mxu0 0
    %1051 = vmatpush1.bf16.msra.mxu0 0
    %1052 = vmatprep.subr.bf16.mxu0 0
    %1053 = vmatpush1.bf16.msra.mxu0 0
    %1054 = vmatprep.subr.bf16.mxu0 0
    %1055 = vmatpush1.bf16.msra.mxu0 0
    %1056 = vmatprep.subr.bf16.mxu0 0
    %1057 = vmatpush1.bf16.msra.mxu0 0
    %1058 = vmatprep.subr.bf16.mxu0 0
    %1059 = vmatpush1.bf16.msra.mxu0 0
    %1060 = vmatprep.subr.bf16.mxu0 0
    %1061 = vmatpush1.bf16.msra.mxu0 0
    %1062 = vmatprep.subr.bf16.mxu0 0
    %1063 = vmatpush1.bf16.msra.mxu0 0
    %1064 = vmatprep.subr.bf16.mxu0 0
    %1065 = vmatpush1.bf16.msra.mxu0 0
    %1066 = vmatprep.subr.bf16.mxu0 0
    %1067 = vmatpush1.bf16.msra.mxu0 0
    %1068 = vmatprep.subr.bf16.mxu0 0
    %1069 = vmatpush1.bf16.msra.mxu0 0
    %1070 = vmatprep.subr.bf16.mxu0 0
    %1071 = vmatpush1.bf16.msra.mxu0 0
    %1072 = vmatprep.subr.bf16.mxu0 0
    %1073 = vmatpush1.bf16.msra.mxu0 0
    %1074 = vmatprep.mubr.bf16.mxu0 0
    %1075 = vmatmul.mubr.bf16.gmra.mrb[0].mxu0 %v1037
    %v1076 = vpop.f32.mrb[0].mxu0
    %v1077 = vadd.f32 0.0, %v1076
    %v1078 = vpop.f32.mrb[0].mxu0
    %v1079 = vpop.f32.mrb[0].mxu0
    %v1080 = vpop.f32.mrb[0].mxu0
    %1081 = vdwg.mxu0
    %1082 = vrot.lane.b32.xlu0 %v226, 40
    %v1083 = vpop.permute.xlu0 %1082
    %v1085 = vsel %vm356, %v1033, 0
    %v1088 = vsel %vm360, %v1083, 0
    %1090 = vmatprep.subr.bf16.mxu0 0
    %1091 = vmatpush1.bf16.msra.mxu0 %v1088
    %1092 = vmatprep.subr.bf16.mxu0 0
    %1093 = vmatpush1.bf16.msra.mxu0 0
    %1094 = vmatprep.subr.bf16.mxu0 0
    %1095 = vmatpush1.bf16.msra.mxu0 0
    %1096 = vmatprep.subr.bf16.mxu0 0
    %1097 = vmatpush1.bf16.msra.mxu0 0
    %1098 = vmatprep.subr.bf16.mxu0 0
    %1099 = vmatpush1.bf16.msra.mxu0 0
    %1100 = vmatprep.subr.bf16.mxu0 0
    %1101 = vmatpush1.bf16.msra.mxu0 0
    %1102 = vmatprep.subr.bf16.mxu0 0
    %1103 = vmatpush1.bf16.msra.mxu0 0
    %1104 = vmatprep.subr.bf16.mxu0 0
    %1105 = vmatpush1.bf16.msra.mxu0 0
    %1106 = vmatprep.subr.bf16.mxu0 0
    %1107 = vmatpush1.bf16.msra.mxu0 0
    %1108 = vmatprep.subr.bf16.mxu0 0
    %1109 = vmatpush1.bf16.msra.mxu0 0
    %1110 = vmatprep.subr.bf16.mxu0 0
    %1111 = vmatpush1.bf16.msra.mxu0 0
    %1112 = vmatprep.subr.bf16.mxu0 0
    %1113 = vmatpush1.bf16.msra.mxu0 0
    %1114 = vmatprep.subr.bf16.mxu0 0
    %1115 = vmatpush1.bf16.msra.mxu0 0
    %1116 = vmatprep.subr.bf16.mxu0 0
    %1117 = vmatpush1.bf16.msra.mxu0 0
    %1118 = vmatprep.subr.bf16.mxu0 0
    %1119 = vmatpush1.bf16.msra.mxu0 0
    %1120 = vmatprep.subr.bf16.mxu0 0
    %1121 = vmatpush1.bf16.msra.mxu0 0
    %1122 = vmatprep.mubr.bf16.mxu0 0
    %1123 = vmatmul.mubr.bf16.gmra.mrb[0].mxu0 %v1085
    %v1124 = vpop.f32.mrb[0].mxu0
    %v1125 = vadd.f32 0.0, %v1124
    %v1126 = vpop.f32.mrb[0].mxu0
    %v1127 = vpop.f32.mrb[0].mxu0
    %v1128 = vpop.f32.mrb[0].mxu0
    %1129 = vdwg.mxu0
    %v1132 = vcombine.low %v399, %v447
    %v1136 = vcombine.low %v625, %v673
    %1137 = vrot.lane.b32.xlu0 %v1136, 8
    %v1138 = vpop.permute.xlu0 %1137
    %v1142 = vcombine.low %v851, %v899
    %1143 = vrot.lane.b32.xlu0 %v1142, 16
    %v1144 = vpop.permute.xlu0 %1143
    %v1148 = vcombine.low %v1077, %v1125
    %1149 = vrot.lane.b32.xlu0 %v1148, 24
    %v1150 = vpop.permute.xlu0 %1149
    %v1152 = vsel %vm233, %v1132, %v1138
    %v1153 = vsel %vm110, %v1152, %v1144
    %vm1154 = vcmask 195584
    %v1155 = vsel %vm1154, %v1153, %v1150
    %v1156 = vpack.c.bf16 %v1155, %v1155
    %v1161 = vunpack.c.l.b16 %v87
    %v1162 = vunpack.c.l.b16 %v88
    %v1163 = vunpack.c.l.b16 %v89
    %v1164 = vunpack.c.l.b16 %v90
    %v1165 = vpack.c.b16 %v1162, %v1161
    %v1166 = vpack.c.b16 %v1164, %v1163
    %v1170 = vsel %vm174, %v1156, 0
    %1172 = vmatprep.subr.bf16.mxu0 0
    %1173 = vmatpush1.bf16.msra.mxu0 %v1165
    %1174 = vmatprep.subr.bf16.mxu0 0
    %1175 = vmatpush1.bf16.msra.mxu0 %v1166
    %1176 = vmatprep.subr.bf16.mxu0 0
    %1177 = vmatpush1.bf16.msra.mxu0 0
    %1178 = vmatprep.subr.bf16.mxu0 0
    %1179 = vmatpush1.bf16.msra.mxu0 0
    %1180 = vmatprep.subr.bf16.mxu0 0
    %1181 = vmatpush1.bf16.msra.mxu0 0
    %1182 = vmatprep.subr.bf16.mxu0 0
    %1183 = vmatpush1.bf16.msra.mxu0 0
    %1184 = vmatprep.subr.bf16.mxu0 0
    %1185 = vmatpush1.bf16.msra.mxu0 0
    %1186 = vmatprep.subr.bf16.mxu0 0
    %1187 = vmatpush1.bf16.msra.mxu0 0
    %1188 = vmatprep.subr.bf16.mxu0 0
    %1189 = vmatpush1.bf16.msra.mxu0 0
    %1190 = vmatprep.subr.bf16.mxu0 0
    %1191 = vmatpush1.bf16.msra.mxu0 0
    %1192 = vmatprep.subr.bf16.mxu0 0
    %1193 = vmatpush1.bf16.msra.mxu0 0
    %1194 = vmatprep.subr.bf16.mxu0 0
    %1195 = vmatpush1.bf16.msra.mxu0 0
    %1196 = vmatprep.subr.bf16.mxu0 0
    %1197 = vmatpush1.bf16.msra.mxu0 0
    %1198 = vmatprep.subr.bf16.mxu0 0
    %1199 = vmatpush1.bf16.msra.mxu0 0
    %1200 = vmatprep.subr.bf16.mxu0 0
    %1201 = vmatpush1.bf16.msra.mxu0 0
    %1202 = vmatprep.subr.bf16.mxu0 0
    %1203 = vmatpush1.bf16.msra.mxu0 0
    %1204 = vmatprep.mubr.bf16.mxu0 0
    %1205 = vmatmul.mubr.bf16.gmra.mrb[0].mxu0 %v1170
    %v1206 = vpop.f32.mrb[0].mxu0
    %v1207 = vadd.f32 0.0, %v1206
    %v1208 = vpop.f32.mrb[0].mxu0
    %v1209 = vpop.f32.mrb[0].mxu0
    %v1210 = vpop.f32.mrb[0].mxu0
    %1211 = vdwg.mxu0
    %1213 = vrot.lane.b32.xlu0 %v1207, 96
    %v1214 = vpop.permute.xlu0 %1213
    %v1216 = vadd.f32 %v213, %v1214
    %v1217 = vmax.f32 %v1216, 0.0
    %v1218 = vld [vmem:[#allocation5] sm:$0xff]
    %1220 = vrot.lane.b32.xlu0 %v1217, 32
    %v1221 = vpop.permute.xlu0 %1220
    %1224 = vrot.lane.b32.xlu0 %v1218, 32
    %v1225 = vpop.permute.xlu0 %1224
    %v1227 = vsel %vm174, %v1221, %v1225
    %v1228 = vpack.c.bf16 %v1227, %v1227
    %v1229 = vld [vmem:[#allocation8] sm:$0xf]
    %v1230 = vld [vmem:[#allocation8 + $0x4] sm:$0xf]
    %v1231 = vld [vmem:[#allocation8 + $0x8] sm:$0xf]
    %v1232 = vld [vmem:[#allocation8 + $0xc] sm:$0xf]
    %v1233 = vld [vmem:[#allocation8 + $0x10] sm:$0xf]
    %v1234 = vld [vmem:[#allocation8 + $0x14] sm:$0xf]
    %v1235 = vld [vmem:[#allocation8 + $0x18] sm:$0xf]
    %v1236 = vld [vmem:[#allocation8 + $0x1c] sm:$0xf]
    %v1238 = vlaneseq
    %v1239 = vshrl.u32 %v1238, 7
    %v1240 = vsub.s32 0, %v1239
    %v1241 = vrot.slane %v81, %v1240
    %v1251 = vunpack.c.l.b16 %v1229
    %v1252 = vunpack.c.l.b16 %v1230
    %v1253 = vunpack.c.l.b16 %v1231
    %v1254 = vunpack.c.l.b16 %v1232
    %v1255 = vunpack.c.l.b16 %v1233
    %v1256 = vunpack.c.l.b16 %v1234
    %v1257 = vunpack.c.l.b16 %v1235
    %v1258 = vunpack.c.l.b16 %v1236
    %v1259 = vpack.c.b16 %v1252, %v1251
    %v1260 = vpack.c.b16 %v1254, %v1253
    %v1261 = vpack.c.b16 %v1256, %v1255
    %v1262 = vpack.c.b16 %v1258, %v1257
    %vm1267 = vcmask 523264
    %v1269 = vsel %vm1267, %v1228, 0
    %1271 = vmatprep.subr.bf16.mxu0 0
    %1272 = vmatpush1.bf16.msra.mxu0 %v1259
    %1273 = vmatprep.subr.bf16.mxu0 0
    %1274 = vmatpush1.bf16.msra.mxu0 %v1260
    %1275 = vmatprep.subr.bf16.mxu0 0
    %1276 = vmatpush1.bf16.msra.mxu0 %v1261
    %1277 = vmatprep.subr.bf16.mxu0 0
    %1278 = vmatpush1.bf16.msra.mxu0 %v1262
    %1279 = vmatprep.subr.bf16.mxu0 0
    %1280 = vmatpush1.bf16.msra.mxu0 0
    %1281 = vmatprep.subr.bf16.mxu0 0
    %1282 = vmatpush1.bf16.msra.mxu0 0
    %1283 = vmatprep.subr.bf16.mxu0 0
    %1284 = vmatpush1.bf16.msra.mxu0 0
    %1285 = vmatprep.subr.bf16.mxu0 0
    %1286 = vmatpush1.bf16.msra.mxu0 0
    %1287 = vmatprep.subr.bf16.mxu0 0
    %1288 = vmatpush1.bf16.msra.mxu0 0
    %1289 = vmatprep.subr.bf16.mxu0 0
    %1290 = vmatpush1.bf16.msra.mxu0 0
    %1291 = vmatprep.subr.bf16.mxu0 0
    %1292 = vmatpush1.bf16.msra.mxu0 0
    %1293 = vmatprep.subr.bf16.mxu0 0
    %1294 = vmatpush1.bf16.msra.mxu0 0
    %1295 = vmatprep.subr.bf16.mxu0 0
    %1296 = vmatpush1.bf16.msra.mxu0 0
    %1297 = vmatprep.subr.bf16.mxu0 0
    %1298 = vmatpush1.bf16.msra.mxu0 0
    %1299 = vmatprep.subr.bf16.mxu0 0
    %1300 = vmatpush1.bf16.msra.mxu0 0
    %1301 = vmatprep.subr.bf16.mxu0 0
    %1302 = vmatpush1.bf16.msra.mxu0 0
    %1303 = vmatprep.mubr.bf16.mxu0 0
    %1304 = vmatmul.mubr.bf16.gmra.mrb[0].mxu0 %v1269
    %v1305 = vpop.f32.mrb[0].mxu0
    %v1306 = vadd.f32 %v1241, %v1305
    %v1307 = vpop.f32.mrb[0].mxu0
    %v1308 = vpop.f32.mrb[0].mxu0
    %v1309 = vpop.f32.mrb[0].mxu0
    %1310 = vdwg.mxu0
    %v1311 = vxor.u32 %v1306, 2147483648
    %v1312 = vmul.f32 %v1311, 1.442695
    %v1313 = vpow.pop %v1312
    %v1314 = vadd.f32 %v1313, 1.0
    %v1315 = vrcp.pop %v1314
    %v1316 = vmul.f32 1.0, %v1315
    %1318 = vrot.lane.b32.xlu0 %v1306, 32
    %v1319 = vpop.permute.xlu0 %1318
    %v1321 = vmul.f32 %v1316, %v1319
    %1323 = vrot.lane.b32.xlu0 %v1321, 64
    %v1324 = vpop.permute.xlu0 %1323
    %v1326 = vadd.f32 %v1306, %v1324
    %v1327 = vtanh.pop %v1326
    %v1328 = vsub.f32 1.0, %v1316
    %1330 = vrot.lane.b32.xlu0 %v1327, 96
    %v1331 = vpop.permute.xlu0 %1330
    %v1333 = vmul.f32 %v1328, %v1331
    %v1334 = vmul.f32 %v1316, %v1225
    %v1335 = vadd.f32 %v1333, %v1334
    %v1336 = vpack.c.bf16 %v1335, %v1335
    %v1338 = vlaneseq
    %v1339 = vshrl.u32 %v1338, 7
    %v1340 = vsub.s32 0, %v1339
    %v1341 = vrot.slane %v82, %v1340
    %1344 = vrot.lane.b32.xlu0 %v1336, 96
    %v1345 = vpop.permute.xlu0 %1344
    %v1350 = vunpack.c.l.b16 %v91
    %v1351 = vunpack.c.l.b16 %v92
    %v1352 = vunpack.c.l.b16 %v93
    %v1353 = vunpack.c.l.b16 %v94
    %v1354 = vpack.c.b16 %v1351, %v1350
    %v1355 = vpack.c.b16 %v1353, %v1352
    %v1359 = vsel %vm174, %v1345, 0
    %1361 = vmatprep.subr.bf16.mxu0 0
    %1362 = vmatpush1.bf16.msra.mxu0 %v1354
    %1363 = vmatprep.subr.bf16.mxu0 0
    %1364 = vmatpush1.bf16.msra.mxu0 %v1355
    %1365 = vmatprep.subr.bf16.mxu0 0
    %1366 = vmatpush1.bf16.msra.mxu0 0
    %1367 = vmatprep.subr.bf16.mxu0 0
    %1368 = vmatpush1.bf16.msra.mxu0 0
    %1369 = vmatprep.subr.bf16.mxu0 0
    %1370 = vmatpush1.bf16.msra.mxu0 0
    %1371 = vmatprep.subr.bf16.mxu0 0
    %1372 = vmatpush1.bf16.msra.mxu0 0
    %1373 = vmatprep.subr.bf16.mxu0 0
    %1374 = vmatpush1.bf16.msra.mxu0 0
    %1375 = vmatprep.subr.bf16.mxu0 0
    %1376 = vmatpush1.bf16.msra.mxu0 0
    %1377 = vmatprep.subr.bf16.mxu0 0
    %1378 = vmatpush1.bf16.msra.mxu0 0
    %1379 = vmatprep.subr.bf16.mxu0 0
    %1380 = vmatpush1.bf16.msra.mxu0 0
    %1381 = vmatprep.subr.bf16.mxu0 0
    %1382 = vmatpush1.bf16.msra.mxu0 0
    %1383 = vmatprep.subr.bf16.mxu0 0
    %1384 = vmatpush1.bf16.msra.mxu0 0
    %1385 = vmatprep.subr.bf16.mxu0 0
    %1386 = vmatpush1.bf16.msra.mxu0 0
    %1387 = vmatprep.subr.bf16.mxu0 0
    %1388 = vmatpush1.bf16.msra.mxu0 0
    %1389 = vmatprep.subr.bf16.mxu0 0
    %1390 = vmatpush1.bf16.msra.mxu0 0
    %1391 = vmatprep.subr.bf16.mxu0 0
    %1392 = vmatpush1.bf16.msra.mxu0 0
    %1393 = vmatprep.mubr.bf16.mxu0 0
    %1394 = vmatmul.mubr.bf16.gmra.mrb[0].mxu0 %v1359
    %v1395 = vpop.f32.mrb[0].mxu0
    %v1396 = vadd.f32 %v1341, %v1395
    %v1397 = vpop.f32.mrb[0].mxu0
    %v1398 = vpop.f32.mrb[0].mxu0
    %v1399 = vpop.f32.mrb[0].mxu0
    %1400 = vdwg.mxu0
    %1402 = vrot.lane.b32.xlu0 %v1335, 96
    %v1403 = vpop.permute.xlu0 %1402
    %1406 = vrot.lane.b32.xlu0 %v1396, 32
    %v1407 = vpop.permute.xlu0 %1406
    %v1409 = vsel %vm174, %v1403, %v1407
    %1410 = vst [vmem:[#allocation10] sm:$0xff] %v1409
    // Predicated region
    $region46: #{tpu_custom_call.1} parent=1 // pred_check
      _
    $region47: #{tpu_custom_call.1} parent=1 // pred_check_branch
      %1412 = sbr.rel (0) target = $region49
    $region48: #{tpu_custom_call.1} parent=1 // pred_region
      %s1414 = ssub.s32 128, 128
      %1415 = vsyncadd [#allocation4], %s1414
      %s1417 = sshll.u32 [#allocation10], 4
      %s1418 = int_to_ptr.vmem [resolvable:$true] %s1417
      %1420 = dma.vmem_to_hbm [thread:$0]  %s1418, 128, %s7, [#allocation4]
    $region49: #{tpu_custom_call.1} parent=1 // pred_fallthru
      _
    // Predicated region
    $region50: #{tpu_custom_call.1} parent=1 // pred_check
      _
    $region51: #{tpu_custom_call.1} parent=1 // pred_check_branch
      %1422 = sbr.rel (0) target = $region53
    $region52: #{tpu_custom_call.1} parent=1 // pred_region
      %1423 = dma.done [#allocation4], 128
    $region53: #{tpu_custom_call.1} parent=1 // pred_fallthru
      _
    %1424 = vsyncpa [#allocation3], 1
    %1425 = vsyncpa [#allocation6], 1
    %1426 = vsyncpa [#allocation9], 1
    %1427 = vsyncpa [#allocation4], 1

</llo_original>
